<compile_context>
chip_gen: v6e
topology: v6e:2x2x1
jax: 0.10.0
libtpu: 0.0.40
codegen_flags: <defaults>
</compile_context>

<pallas_src>
import jax
import jax.numpy as jnp
from jax.experimental import pallas as pl
from jax.experimental.pallas import tpu as pltpu

LANE = 128
SUBLANE = 8


def _round_up(n, m):
    return ((n + m - 1) // m) * m


def _pad_to(a, shape, dtype):
    """Cast to `dtype` and zero-pad `a` up to `shape` (no-op if already there)."""
    a = jnp.asarray(a, dtype)
    if a.shape == tuple(shape):
        return a
    pad = [(0, s - d) for s, d in zip(shape, a.shape)]
    return jnp.pad(a, pad)


# --------------------------------------------------------------------------- #
# Kernel
# --------------------------------------------------------------------------- #
def _output_nn_kernel(x_ref, w1_ref, b1_ref, w2_ref, b2_ref, w3_ref, b3_ref,
                      o_ref):
    """One batch tile of fc1 -> leaky_relu(1/5.5) -> fc2 -> leaky_relu -> fc3."""
    slope = jnp.float32(1.0 / 5.5)

    # Matmul operands stay in the compute dtype (bf16-native MXU when bf16);
    # accumulation / bias / activation run in f32; cast only at the final store.
    x = x_ref[...]
    h = jnp.dot(x, w1_ref[...], preferred_element_type=jnp.float32) + b1_ref[...]
    h = jnp.maximum(h, slope * h)                 # leaky_relu(h, 1/5.5), one vmax

    h = h.astype(w2_ref.dtype)
    h = jnp.dot(h, w2_ref[...], preferred_element_type=jnp.float32) + b2_ref[...]
    h = jnp.maximum(h, slope * h)

    h = h.astype(w3_ref.dtype)
    y = jnp.dot(h, w3_ref[...], preferred_element_type=jnp.float32) + b3_ref[...]
    o_ref[...] = y.astype(o_ref.dtype)


# --------------------------------------------------------------------------- #
# One-time weight preparation (hoisted out of the per-call path)
# --------------------------------------------------------------------------- #
def prepare_output_nn_params(w1, b1, w2, b2, w3, b3, *, compute_dtype=None):
    """Pad / cast weights once; cache the returned value across calls.

    Weights must already be transposed to (in_features, out_features).
    `compute_dtype=jnp.bfloat16` opts into the bf16-native MXU path.
    """
    in_size, hidden = w1.shape
    out_size = w3.shape[1]
    wdt = jnp.dtype(compute_dtype if compute_dtype is not None else w1.dtype)

    # Hidden dim is internal only: pad to a full lane group so intermediates
    # are lane-dense (zero-padded rows/cols are numerically exact).
    hidden_p = _round_up(hidden, LANE)
    # Output dim: store the true width when it is small (< 1 lane group) or
    # already lane-aligned; only pad (and later slice) large unaligned widths.
    if out_size < LANE or out_size % LANE == 0:
        out_p = out_size
    else:
        out_p = _round_up(out_size, LANE)

    params = (
        _pad_to(w1, (in_size, hidden_p), wdt),
        _pad_to(jnp.reshape(b1, (1, -1)), (1, hidden_p), jnp.float32),
        _pad_to(w2, (hidden_p, hidden_p), wdt),
        _pad_to(jnp.reshape(b2, (1, -1)), (1, hidden_p), jnp.float32),
        _pad_to(w3, (hidden_p, out_p), wdt),
        _pad_to(jnp.reshape(b3, (1, -1)), (1, out_p), jnp.float32),
    )
    meta = dict(in_size=in_size, hidden=hidden, out_size=out_size,
                hidden_p=hidden_p, out_p=out_p, compute_dtype=wdt)
    return params, meta


# --------------------------------------------------------------------------- #
# Generation-aware tile / VMEM selection
# --------------------------------------------------------------------------- #
def _vmem_capacity_bytes():
    try:
        info = pltpu.get_tpu_info()
        cap = getattr(info, "vmem_capacity_bytes", None)
        if cap:
            return int(cap)
    except Exception:
        pass
    return 64 * 1024 * 1024        # conservative fallback (v7x per-TC VMEM)


def _pick_batch_tile(B, in_size, hidden_p, out_p, wdt, out_dtype, weight_bytes):
    vmem_cap = _vmem_capacity_bytes()
    # Per-step streaming budget: ~77 MiB on 128 MiB parts (v5e/v6e), ~38 MiB on
    # 64 MiB parts (v7x), leaving headroom for Mosaic internal scratch.
    budget = max(16 * 1024 * 1024,
                 min(int(0.6 * vmem_cap), vmem_cap - 24 * 1024 * 1024))

    xb = jnp.dtype(wdt).itemsize
    ob = jnp.dtype(out_dtype).itemsize
    resident = weight_bytes        # grid-invariant blocks requested single-buffered

    batch_tile = SUBLANE
    for cand in (2048, 1024, 512, 256, 128, 64, 32, 16, 8):
        stream = 2 * cand * (in_size * xb + out_p * ob)    # double-buffered x / out
        scratch = 2 * cand * hidden_p * 4                  # f32 intermediates
        if resident + stream + scratch <= budget:
            batch_tile = cand
            break

    # Never larger than the (sublane-padded) batch.
    batch_tile = min(batch_tile, _round_up(B, SUBLANE))
    # Keep >= ~8 grid steps when the batch allows (so v7x's 2 TCs each see
    # >= ~4 pipelined steps), but never shrink below the 256-row roofline knee.
    while batch_tile > 256 and -(-B // batch_tile) < 8:
        batch_tile //= 2
    batch_tile = max(_round_up(batch_tile, SUBLANE), SUBLANE)
    return batch_tile, vmem_cap


# --------------------------------------------------------------------------- #
# pipeline_mode=pl.Buffered(1) support probe (version-dependent, with fallback)
# --------------------------------------------------------------------------- #
_SINGLE_BUFFER_WEIGHTS_OK = None   # resolved on first successful call


def _weight_pipeline_modes():
    if _SINGLE_BUFFER_WEIGHTS_OK is False:
        return [None]
    try:
        buffered = pl.Buffered(1)
    except Exception:
        return [None]
    if _SINGLE_BUFFER_WEIGHTS_OK:
        return [buffered]
    return [buffered, None]


def _invariant_spec(shape, pipeline_mode):
    if pipeline_mode is None:
        return pl.BlockSpec(shape, lambda i: (0, 0))
    return pl.BlockSpec(shape, lambda i: (0, 0), pipeline_mode=pipeline_mode)


# --------------------------------------------------------------------------- #
# Apply
# --------------------------------------------------------------------------- #
def output_nn_apply(x, prepared):
    """Run the fused MLP on x (B, input_size) with prepared weights."""
    global _SINGLE_BUFFER_WEIGHTS_OK
    params, meta = prepared
    w1p, b1p, w2p, b2p, w3p, b3p = params

    out_dtype = x.dtype
    B, in_size = x.shape
    if in_size != meta["in_size"]:
        raise ValueError("x feature dim does not match prepared weights")
    hidden, out_size = meta["hidden"], meta["out_size"]
    hidden_p, out_p = meta["hidden_p"], meta["out_p"]
    wdt = meta["compute_dtype"]

    xb = jnp.dtype(wdt).itemsize
    ob = jnp.dtype(out_dtype).itemsize
    weight_bytes = ((w1p.size + w2p.size + w3p.size) * xb +
                    (b1p.size + b2p.size + b3p.size) * 4)

    batch_tile, vmem_cap = _pick_batch_tile(
        B, in_size, hidden_p, out_p, wdt, out_dtype, weight_bytes)

    # Pad batch so any tile size works (no divisibility assert).
    B_pad = _round_up(B, batch_tile)
    xk = x.astype(wdt)
    if B_pad != B:
        xk = jnp.pad(xk, ((0, B_pad - B), (0, 0)))
    grid = (B_pad // batch_tile,)

    step_bytes = (weight_bytes +
                  2 * batch_tile * (in_size * xb + out_p * ob) +
                  2 * batch_tile * hidden_p * 4)
    # Extra weight_bytes of slack covers the double-buffered-weights fallback.
    vmem_limit = int(min(vmem_cap - 16 * 1024 * 1024,
                         max(16 * 1024 * 1024, 2 * step_bytes + weight_bytes)))

    # Cost estimate from TRUE (unpadded) sizes so XLA does not over-schedule.
    flops = 2 * B * (in_size * hidden + hidden * hidden + hidden * out_size)
    bytes_accessed = int(B * in_size * xb + B * out_size * ob +
                         (in_size * hidden + hidden * hidden +
                          hidden * out_size) * xb +
                         (2 * hidden + out_size) * 4)

    def build(pipeline_mode):
        return pl.pallas_call(
            _output_nn_kernel,
            out_shape=jax.ShapeDtypeStruct((B_pad, out_p), out_dtype),
            grid_spec=pltpu.PrefetchScalarGridSpec(
                num_scalar_prefetch=0,
                grid=grid,
                in_specs=[
                    pl.BlockSpec((batch_tile, in_size), lambda i: (i, 0)),  # x
                    _invariant_spec((in_size, hidden_p), pipeline_mode),    # w1
                    _invariant_spec((1, hidden_p), pipeline_mode),          # b1
                    _invariant_spec((hidden_p, hidden_p), pipeline_mode),   # w2
                    _invariant_spec((1, hidden_p), pipeline_mode),          # b2
                    _invariant_spec((hidden_p, out_p), pipeline_mode),      # w3
                    _invariant_spec((1, out_p), pipeline_mode),             # b3
                ],
                out_specs=pl.BlockSpec((batch_tile, out_p), lambda i: (i, 0)),
            ),
            compiler_params=pltpu.CompilerParams(
                dimension_semantics=("parallel",),
                vmem_limit_bytes=vmem_limit,
            ),
            cost_estimate=pl.CostEstimate(
                flops=int(flops), transcendentals=0,
                bytes_accessed=bytes_accessed),
        )

    modes = _weight_pipeline_modes()
    out_padded = None
    for idx, mode in enumerate(modes):
        try:
            out_padded = build(mode)(xk, w1p, b1p, w2p, b2p, w3p, b3p)
            if mode is not None:
                _SINGLE_BUFFER_WEIGHTS_OK = True
            break
        except Exception:
            if mode is not None:
                _SINGLE_BUFFER_WEIGHTS_OK = False
            if idx == len(modes) - 1:
                raise

    out = out_padded
    if B_pad != B:
        out = out[:B]
    if out_p != out_size:
        out = out[:, :out_size]
    return out


def output_nn(x, w1, b1, w2, b2, w3, b3, *, compute_dtype=None):
    """Convenience one-shot wrapper. For repeated calls, cache
    prepare_output_nn_params(...) once and call output_nn_apply."""
    prepared = prepare_output_nn_params(w1, b1, w2, b2, w3, b3,
                                        compute_dtype=compute_dtype)
    return output_nn_apply(x, prepared)


# --------------------------------------------------------------------------- #
# Reference / init / test
# --------------------------------------------------------------------------- #
def _init_linear(key, fan_in, fan_out):
    """Deterministic init mimicking nn.Linear's uniform(-1/sqrt(fan_in), ...).

    Returns W already transposed to (fan_in, fan_out) and bias (fan_out,).
    """
    kw, kb = jax.random.split(key)
    bound = 1.0 / jnp.sqrt(jnp.float32(fan_in))
    w = jax.random.uniform(kw, (fan_in, fan_out), jnp.float32, -bound, bound)
    b = jax.random.uniform(kb, (fan_out,), jnp.float32, -bound, bound)
    return w, b


def _reference(x, w1, b1, w2, b2, w3, b3):
    slope = 1.0 / 5.5
    h = x @ w1 + b1
    h = jnp.where(h >= 0, h, slope * h)
    h = h @ w2 + b2
    h = jnp.where(h >= 0, h, slope * h)
    return h @ w3 + b3


if __name__ == "__main__":
    batch = 512
    input_size = 32
    hidden_size = 32
    output_size = 16

    key = jax.random.PRNGKey(0)
    kx, k1, k2, k3 = jax.random.split(key, 4)

    x = jax.random.normal(kx, (batch, input_size), jnp.float32)
    w1, b1 = _init_linear(k1, input_size, hidden_size)
    w2, b2 = _init_linear(k2, hidden_size, hidden_size)
    w3, b3 = _init_linear(k3, hidden_size, output_size)

    # One-time weight preparation, reused across calls (hoisted out of the
    # per-call path).
    prepared = prepare_output_nn_params(w1, b1, w2, b2, w3, b3)

    out = jax.block_until_ready(output_nn_apply(x, prepared))
    ref = _reference(x, w1, b1, w2, b2, w3, b3)
    assert out.shape == (batch, output_size)
    assert jnp.allclose(out, ref, atol=1e-5, rtol=1e-5)

    # Batch that is NOT a multiple of the tile (tail-padding path), reusing the
    # same prepared weights.
    xb = jax.random.normal(kx, (37, input_size), jnp.float32)
    outb = jax.block_until_ready(output_nn_apply(xb, prepared))
    refb = _reference(xb, w1, b1, w2, b2, w3, b3)
    assert outb.shape == (37, output_size)
    assert jnp.allclose(outb, refb, atol=1e-5, rtol=1e-5)

    # Opt-in bf16 MXU path (f32 accumulation); looser tolerance vs f32 reference.
    prepared_bf16 = prepare_output_nn_params(w1, b1, w2, b2, w3, b3,
                                             compute_dtype=jnp.bfloat16)
    outh = jax.block_until_ready(output_nn_apply(x, prepared_bf16))
    assert outh.shape == (batch, output_size)
    assert jnp.allclose(outh, ref, atol=1e-1, rtol=1e-1)

    print("KERNEL_OK")
</pallas_src>

<mosaic_0001>
module attributes {stable_mosaic.version = 11 : i64} {
  func.func @_output_nn_kernel(%arg0: i32, %arg1: memref<256x32xf32, #tpu.memory_space<vmem>>, %arg2: memref<32x128xf32, #tpu.memory_space<vmem>>, %arg3: memref<1x128xf32, #tpu.memory_space<vmem>>, %arg4: memref<128x128xf32, #tpu.memory_space<vmem>>, %arg5: memref<1x128xf32, #tpu.memory_space<vmem>>, %arg6: memref<128x16xf32, #tpu.memory_space<vmem>>, %arg7: memref<1x16xf32, #tpu.memory_space<vmem>>, %arg8: memref<256x16xf32, #tpu.memory_space<vmem>>) attributes {dimension_semantics = [#tpu.dimension_semantics<parallel>], iteration_bounds = array<i64: 2>, scalar_prefetch = 0 : i64, scratch_operands = 0 : i64, tpu.core_type = #tpu.core_type<tc>, window_params = [{transform_indices = @transform_0, window_bounds = array<i64: 256, 32>}, {pipeline_mode = #tpu.pipeline_mode<synchronous>, transform_indices = @transform_1, window_bounds = array<i64: 32, 128>}, {pipeline_mode = #tpu.pipeline_mode<synchronous>, transform_indices = @transform_2, window_bounds = array<i64: 1, 128>}, {pipeline_mode = #tpu.pipeline_mode<synchronous>, transform_indices = @transform_3, window_bounds = array<i64: 128, 128>}, {pipeline_mode = #tpu.pipeline_mode<synchronous>, transform_indices = @transform_4, window_bounds = array<i64: 1, 128>}, {pipeline_mode = #tpu.pipeline_mode<synchronous>, transform_indices = @transform_5, window_bounds = array<i64: 128, 16>}, {pipeline_mode = #tpu.pipeline_mode<synchronous>, transform_indices = @transform_6, window_bounds = array<i64: 1, 16>}, {transform_indices = @transform_7, window_bounds = array<i64: 256, 16>}]} {
    %c0 = arith.constant 0 : index
    %c0_0 = arith.constant 0 : index
    %0 = vector.load %arg1[%c0, %c0_0] : memref<256x32xf32, #tpu.memory_space<vmem>>, vector<256x32xf32>
    %c0_1 = arith.constant 0 : index
    %c0_2 = arith.constant 0 : index
    %1 = vector.load %arg2[%c0_1, %c0_2] : memref<32x128xf32, #tpu.memory_space<vmem>>, vector<32x128xf32>
    %cst = arith.constant dense<0.000000e+00> : vector<256x128xf32>
    %2 = tpu.matmul %0, %1, %cst {dimension_numbers = #tpu.dot_dimension_numbers<[1], [0], [0], [1], [0, 0, 1, 1], [], []>} : vector<256x32xf32>, vector<32x128xf32>, vector<256x128xf32> -> vector<256x128xf32>
    %c0_3 = arith.constant 0 : index
    %c0_4 = arith.constant 0 : index
    %3 = vector.load %arg3[%c0_3, %c0_4] : memref<1x128xf32, #tpu.memory_space<vmem>>, vector<1x128xf32>
    %4 = vector.broadcast %3 : vector<1x128xf32> to vector<256x128xf32>
    %5 = arith.addf %2, %4 : vector<256x128xf32>
    %cst_5 = arith.constant 0.181818187 : f32
    %6 = vector.broadcast %cst_5 : f32 to vector<256x128xf32>
    %7 = arith.mulf %6, %5 : vector<256x128xf32>
    %8 = arith.maximumf %5, %7 : vector<256x128xf32>
    %c0_6 = arith.constant 0 : index
    %c0_7 = arith.constant 0 : index
    %9 = vector.load %arg4[%c0_6, %c0_7] : memref<128x128xf32, #tpu.memory_space<vmem>>, vector<128x128xf32>
    %cst_8 = arith.constant dense<0.000000e+00> : vector<256x128xf32>
    %10 = tpu.matmul %8, %9, %cst_8 {dimension_numbers = #tpu.dot_dimension_numbers<[1], [0], [0], [1], [0, 0, 1, 1], [], []>} : vector<256x128xf32>, vector<128x128xf32>, vector<256x128xf32> -> vector<256x128xf32>
    %c0_9 = arith.constant 0 : index
    %c0_10 = arith.constant 0 : index
    %11 = vector.load %arg5[%c0_9, %c0_10] : memref<1x128xf32, #tpu.memory_space<vmem>>, vector<1x128xf32>
    %12 = vector.broadcast %11 : vector<1x128xf32> to vector<256x128xf32>
    %13 = arith.addf %10, %12 : vector<256x128xf32>
    %cst_11 = arith.constant 0.181818187 : f32
    %14 = vector.broadcast %cst_11 : f32 to vector<256x128xf32>
    %15 = arith.mulf %14, %13 : vector<256x128xf32>
    %16 = arith.maximumf %13, %15 : vector<256x128xf32>
    %c0_12 = arith.constant 0 : index
    %c0_13 = arith.constant 0 : index
    %17 = vector.load %arg6[%c0_12, %c0_13] : memref<128x16xf32, #tpu.memory_space<vmem>>, vector<128x16xf32>
    %cst_14 = arith.constant dense<0.000000e+00> : vector<256x16xf32>
    %18 = tpu.matmul %16, %17, %cst_14 {dimension_numbers = #tpu.dot_dimension_numbers<[1], [0], [0], [1], [0, 0, 1, 1], [], []>} : vector<256x128xf32>, vector<128x16xf32>, vector<256x16xf32> -> vector<256x16xf32>
    %c0_15 = arith.constant 0 : index
    %c0_16 = arith.constant 0 : index
    %19 = vector.load %arg7[%c0_15, %c0_16] : memref<1x16xf32, #tpu.memory_space<vmem>>, vector<1x16xf32>
    %20 = vector.broadcast %19 : vector<1x16xf32> to vector<256x16xf32>
    %21 = arith.addf %18, %20 : vector<256x16xf32>
    %c0_17 = arith.constant 0 : index
    %c0_18 = arith.constant 0 : index
    %22 = vector.load %arg8[%c0_17, %c0_18] : memref<256x16xf32, #tpu.memory_space<vmem>>, vector<256x16xf32>
    tpu.vector_store %arg8[%c0_17, %c0_18], %21 {strides = array<i32>} : memref<256x16xf32, #tpu.memory_space<vmem>>, vector<256x16xf32>,
    return
  }
  func.func @transform_0(%arg0: i32) -> (i32, i32) {
    %c0_i32 = arith.constant 0 : i32
    %c0_i32_0 = arith.constant 0 : i32
    return %arg0, %c0_i32 : i32, i32
  }
  func.func @transform_1(%arg0: i32) -> (i32, i32) {
    %c0_i32 = arith.constant 0 : i32
    %c0_i32_0 = arith.constant 0 : i32
    %c0_i32_1 = arith.constant 0 : i32
    return %c0_i32, %c0_i32_0 : i32, i32
  }
  func.func @transform_2(%arg0: i32) -> (i32, i32) {
    %c0_i32 = arith.constant 0 : i32
    %c0_i32_0 = arith.constant 0 : i32
    %c0_i32_1 = arith.constant 0 : i32
    return %c0_i32, %c0_i32_0 : i32, i32
  }
  func.func @transform_3(%arg0: i32) -> (i32, i32) {
    %c0_i32 = arith.constant 0 : i32
    %c0_i32_0 = arith.constant 0 : i32
    %c0_i32_1 = arith.constant 0 : i32
    return %c0_i32, %c0_i32_0 : i32, i32
  }
  func.func @transform_4(%arg0: i32) -> (i32, i32) {
    %c0_i32 = arith.constant 0 : i32
    %c0_i32_0 = arith.constant 0 : i32
    %c0_i32_1 = arith.constant 0 : i32
    return %c0_i32, %c0_i32_0 : i32, i32
  }
  func.func @transform_5(%arg0: i32) -> (i32, i32) {
    %c0_i32 = arith.constant 0 : i32
    %c0_i32_0 = arith.constant 0 : i32
    %c0_i32_1 = arith.constant 0 : i32
    return %c0_i32, %c0_i32_0 : i32, i32
  }
  func.func @transform_6(%arg0: i32) -> (i32, i32) {
    %c0_i32 = arith.constant 0 : i32
    %c0_i32_0 = arith.constant 0 : i32
    %c0_i32_1 = arith.constant 0 : i32
    return %c0_i32, %c0_i32_0 : i32, i32
  }
  func.func @transform_7(%arg0: i32) -> (i32, i32) {
    %c0_i32 = arith.constant 0 : i32
    %c0_i32_0 = arith.constant 0 : i32
    return %arg0, %c0_i32 : i32, i32
  }
}

module attributes {stable_mosaic.version = 11 : i64} {
  func.func @_output_nn_kernel(%arg0: i32, %arg1: memref<256x32xf32, #tpu.memory_space<vmem>>, %arg2: memref<32x128xf32, #tpu.memory_space<vmem>>, %arg3: memref<1x128xf32, #tpu.memory_space<vmem>>, %arg4: memref<128x128xf32, #tpu.memory_space<vmem>>, %arg5: memref<1x128xf32, #tpu.memory_space<vmem>>, %arg6: memref<128x16xf32, #tpu.memory_space<vmem>>, %arg7: memref<1x16xf32, #tpu.memory_space<vmem>>, %arg8: memref<256x16xf32, #tpu.memory_space<vmem>>) attributes {dimension_semantics = [#tpu.dimension_semantics<parallel>], iteration_bounds = array<i64: 2>, scalar_prefetch = 0 : i64, scratch_operands = 0 : i64, tpu.core_type = #tpu.core_type<tc>, window_params = [{transform_indices = @transform_0, window_bounds = array<i64: 256, 32>}, {pipeline_mode = #tpu.pipeline_mode<synchronous>, transform_indices = @transform_1, window_bounds = array<i64: 32, 128>}, {pipeline_mode = #tpu.pipeline_mode<synchronous>, transform_indices = @transform_2, window_bounds = array<i64: 1, 128>}, {pipeline_mode = #tpu.pipeline_mode<synchronous>, transform_indices = @transform_3, window_bounds = array<i64: 128, 128>}, {pipeline_mode = #tpu.pipeline_mode<synchronous>, transform_indices = @transform_4, window_bounds = array<i64: 1, 128>}, {pipeline_mode = #tpu.pipeline_mode<synchronous>, transform_indices = @transform_5, window_bounds = array<i64: 128, 16>}, {pipeline_mode = #tpu.pipeline_mode<synchronous>, transform_indices = @transform_6, window_bounds = array<i64: 1, 16>}, {transform_indices = @transform_7, window_bounds = array<i64: 256, 16>}]} {
    %c0 = arith.constant 0 : index
    %c0_0 = arith.constant 0 : index
    %0 = vector.load %arg1[%c0, %c0_0] : memref<256x32xf32, #tpu.memory_space<vmem>>, vector<256x32xf32>
    %c0_1 = arith.constant 0 : index
    %c0_2 = arith.constant 0 : index
    %1 = vector.load %arg2[%c0_1, %c0_2] : memref<32x128xf32, #tpu.memory_space<vmem>>, vector<32x128xf32>
    %cst = arith.constant dense<0.000000e+00> : vector<256x128xf32>
    %2 = tpu.matmul %0, %1, %cst {dimension_numbers = #tpu.dot_dimension_numbers<[1], [0], [0], [1], [0, 0, 1, 1], [], []>} : vector<256x32xf32>, vector<32x128xf32>, vector<256x128xf32> -> vector<256x128xf32>
    %c0_3 = arith.constant 0 : index
    %c0_4 = arith.constant 0 : index
    %3 = vector.load %arg3[%c0_3, %c0_4] : memref<1x128xf32, #tpu.memory_space<vmem>>, vector<1x128xf32>
    %4 = vector.broadcast %3 : vector<1x128xf32> to vector<256x128xf32>
    %5 = arith.addf %2, %4 : vector<256x128xf32>
    %cst_5 = arith.constant 0.181818187 : f32
    %6 = vector.broadcast %cst_5 : f32 to vector<256x128xf32>
    %7 = arith.mulf %6, %5 : vector<256x128xf32>
    %8 = arith.maximumf %5, %7 : vector<256x128xf32>
    %c0_6 = arith.constant 0 : index
    %c0_7 = arith.constant 0 : index
    %9 = vector.load %arg4[%c0_6, %c0_7] : memref<128x128xf32, #tpu.memory_space<vmem>>, vector<128x128xf32>
    %cst_8 = arith.constant dense<0.000000e+00> : vector<256x128xf32>
    %10 = tpu.matmul %8, %9, %cst_8 {dimension_numbers = #tpu.dot_dimension_numbers<[1], [0], [0], [1], [0, 0, 1, 1], [], []>} : vector<256x128xf32>, vector<128x128xf32>, vector<256x128xf32> -> vector<256x128xf32>
    %c0_9 = arith.constant 0 : index
    %c0_10 = arith.constant 0 : index
    %11 = vector.load %arg5[%c0_9, %c0_10] : memref<1x128xf32, #tpu.memory_space<vmem>>, vector<1x128xf32>
    %12 = vector.broadcast %11 : vector<1x128xf32> to vector<256x128xf32>
    %13 = arith.addf %10, %12 : vector<256x128xf32>
    %cst_11 = arith.constant 0.181818187 : f32
    %14 = vector.broadcast %cst_11 : f32 to vector<256x128xf32>
    %15 = arith.mulf %14, %13 : vector<256x128xf32>
    %16 = arith.maximumf %13, %15 : vector<256x128xf32>
    %c0_12 = arith.constant 0 : index
    %c0_13 = arith.constant 0 : index
    %17 = vector.load %arg6[%c0_12, %c0_13] : memref<128x16xf32, #tpu.memory_space<vmem>>, vector<128x16xf32>
    %cst_14 = arith.constant dense<0.000000e+00> : vector<256x16xf32>
    %18 = tpu.matmul %16, %17, %cst_14 {dimension_numbers = #tpu.dot_dimension_numbers<[1], [0], [0], [1], [0, 0, 1, 1], [], []>} : vector<256x128xf32>, vector<128x16xf32>, vector<256x16xf32> -> vector<256x16xf32>
    %c0_15 = arith.constant 0 : index
    %c0_16 = arith.constant 0 : index
    %19 = vector.load %arg7[%c0_15, %c0_16] : memref<1x16xf32, #tpu.memory_space<vmem>>, vector<1x16xf32>
    %20 = vector.broadcast %19 : vector<1x16xf32> to vector<256x16xf32>
    %21 = arith.addf %18, %20 : vector<256x16xf32>
    %c0_17 = arith.constant 0 : index
    %c0_18 = arith.constant 0 : index
    %22 = vector.load %arg8[%c0_17, %c0_18] : memref<256x16xf32, #tpu.memory_space<vmem>>, vector<256x16xf32>
    tpu.vector_store %arg8[%c0_17, %c0_18], %21 {strides = array<i32>} : memref<256x16xf32, #tpu.memory_space<vmem>>, vector<256x16xf32>,
    return
  }
  func.func @transform_0(%arg0: i32) -> (i32, i32) {
    %c0_i32 = arith.constant 0 : i32
    %c0_i32_0 = arith.constant 0 : i32
    return %arg0, %c0_i32 : i32, i32
  }
  func.func @transform_1(%arg0: i32) -> (i32, i32) {
    %c0_i32 = arith.constant 0 : i32
    %c0_i32_0 = arith.constant 0 : i32
    %c0_i32_1 = arith.constant 0 : i32
    return %c0_i32, %c0_i32_0 : i32, i32
  }
  func.func @transform_2(%arg0: i32) -> (i32, i32) {
    %c0_i32 = arith.constant 0 : i32
    %c0_i32_0 = arith.constant 0 : i32
    %c0_i32_1 = arith.constant 0 : i32
    return %c0_i32, %c0_i32_0 : i32, i32
  }
  func.func @transform_3(%arg0: i32) -> (i32, i32) {
    %c0_i32 = arith.constant 0 : i32
    %c0_i32_0 = arith.constant 0 : i32
    %c0_i32_1 = arith.constant 0 : i32
    return %c0_i32, %c0_i32_0 : i32, i32
  }
  func.func @transform_4(%arg0: i32) -> (i32, i32) {
    %c0_i32 = arith.constant 0 : i32
    %c0_i32_0 = arith.constant 0 : i32
    %c0_i32_1 = arith.constant 0 : i32
    return %c0_i32, %c0_i32_0 : i32, i32
  }
  func.func @transform_5(%arg0: i32) -> (i32, i32) {
    %c0_i32 = arith.constant 0 : i32
    %c0_i32_0 = arith.constant 0 : i32
    %c0_i32_1 = arith.constant 0 : i32
    return %c0_i32, %c0_i32_0 : i32, i32
  }
  func.func @transform_6(%arg0: i32) -> (i32, i32) {
    %c0_i32 = arith.constant 0 : i32
    %c0_i32_0 = arith.constant 0 : i32
    %c0_i32_1 = arith.constant 0 : i32
    return %c0_i32, %c0_i32_0 : i32, i32
  }
  func.func @transform_7(%arg0: i32) -> (i32, i32) {
    %c0_i32 = arith.constant 0 : i32
    %c0_i32_0 = arith.constant 0 : i32
    return %arg0, %c0_i32 : i32, i32
  }
}

</mosaic_0001>

<llo_original>
// kernel: tpu_custom_call.1
$region0: #{tpu_custom_call.1}
  #allocation0 [shape = 'u32[]', space=smem, size = 0x4, offset = 0x4, fixed_abs, tag = 'smem constant byte address 0x4 - core index']
  #allocation1 [shape = 'u32[144,128]{1,0:T(1,128)}', space=vmem, size = 0x12000, scoped, tag = 'internal scratch']
  %s0 = inlined_call_operand.vmem [shape: f32[512,32], index: 0, kind: input, shape index: {}]
  %s1 = inlined_call_operand.vmem [shape: f32[32,128], index: 1, kind: input, shape index: {}]
  %s2 = inlined_call_operand.vmem [shape: f32[1,128], index: 2, kind: input, shape index: {}]
  %s3 = inlined_call_operand.vmem [shape: f32[128,128], index: 3, kind: input, shape index: {}]
  %s4 = inlined_call_operand.vmem [shape: f32[1,128], index: 4, kind: input, shape index: {}]
  %s5 = inlined_call_operand.vmem [shape: f32[128,16], index: 5, kind: input, shape index: {}]
  %s6 = inlined_call_operand.vmem [shape: f32[1,16], index: 6, kind: input, shape index: {}]
  %s7 = inlined_call_operand.vmem [shape: f32[512,16], index: 7, kind: output, shape index: {}]
  %s8 = sld [smem:[#allocation0]]
  $region61: #{tpu_custom_call.1} parent=0
    _
  %s10 = ssub.s32 1, %s8
  %s11 = scalar_select 0, %s10, %s8
  loop: start=0, step=1, limit=4
  $region2: #{tpu_custom_call.1} parent=0 // loop_pre_header
    _
  $region3: #{tpu_custom_call.1} parent=0 // loop_header
    %s13 = sphi 0, %s17
    %p14 = scmp.ge.s32.totalorder %s13, 4
    %s23 = sphi 0, %s25
    %s26 = sphi 0, %s23
    %s27 = sphi 0, %s26
    %s43 = sphi 0, %s27
    %s47 = sphi 0, %s47
    %s49 = sphi 0, %s47
    %s50 = sphi 0, %s49
    %s64 = sphi 0, %s50
    %s68 = sphi 0, %s68
    %s70 = sphi 0, %s68
    %s71 = sphi 0, %s70
    %s85 = sphi 0, %s71
    %s89 = sphi 0, %s89
    %s91 = sphi 0, %s89
    %s92 = sphi 0, %s91
    %s106 = sphi 0, %s92
    %s110 = sphi 0, %s110
    %s112 = sphi 0, %s110
    %s113 = sphi 0, %s112
    %s127 = sphi 0, %s113
    %s131 = sphi 0, %s131
    %s133 = sphi 0, %s131
    %s134 = sphi 0, %s133
    %s148 = sphi 0, %s134
    %s152 = sphi 0, %s152
    %s154 = sphi 0, %s152
    %s155 = sphi 0, %s154
    %s169 = sphi 0, %s155
    %s175 = sphi 0, %s177
    %s178 = sphi 0, %s175
    %s179 = sphi 0, %s178
    %s195 = sphi 0, %s179
  $region4: #{tpu_custom_call.1} parent=0 // loop_header_branch
    %16 = sbr.rel (%p14) target = $region8
  $region5: #{tpu_custom_call.1} parent=0 // loop_body
    %s18 = ssub.s32 %s13, 1
    %s19 = ssub.s32 %s13, 2
    %s20 = sadd.s32 %s13, 1
    %s21 = ssub.s32 %s13, %s20
    %p22 = scmp.eq.s32.totalorder %s21, 0
    %s24 = sadd.s32 %s23, 1
    %s25 = scalar_select %p22, %s23, %s24
    %p28 = pneg %p22
    %p29 = scmp.eq.s32.totalorder %s13, 1
    %p30 = por %p28, %p29
    %p31 = scmp.ne.s32.totalorder %s23, %s26
    %p32 = scmp.eq.s32.totalorder %s13, 0
    %p33 = por %p31, %p32
    %p34 = scmp.ne.s32.totalorder %s23, %s26
    %p35 = scmp.eq.s32.totalorder %s18, 1
    %p36 = por %p34, %p35
    %p37 = scmp.ne.s32.totalorder %s26, %s27
    %p38 = scmp.eq.s32.totalorder %s18, 0
    %p39 = por %p37, %p38
    %p40 = scmp.ne.s32.totalorder %s26, %s27
    %p41 = scmp.eq.s32.totalorder %s19, 1
    %p42 = por %p40, %p41
    %p44 = scmp.ne.s32.totalorder %s27, %s43
    %p45 = scmp.eq.s32.totalorder %s19, 0
    %p46 = por %p44, %p45
    %s48 = sadd.s32 %s47, 1
    %p51 = scmp.eq.s32.totalorder %s13, 1
    %p52 = scmp.ne.s32.totalorder %s47, %s49
    %p53 = scmp.eq.s32.totalorder %s13, 0
    %p54 = por %p52, %p53
    %p55 = scmp.ne.s32.totalorder %s47, %s49
    %p56 = scmp.eq.s32.totalorder %s18, 1
    %p57 = por %p55, %p56
    %p58 = scmp.ne.s32.totalorder %s49, %s50
    %p59 = scmp.eq.s32.totalorder %s18, 0
    %p60 = por %p58, %p59
    %p61 = scmp.ne.s32.totalorder %s49, %s50
    %p62 = scmp.eq.s32.totalorder %s19, 1
    %p63 = por %p61, %p62
    %p65 = scmp.ne.s32.totalorder %s50, %s64
    %p66 = scmp.eq.s32.totalorder %s19, 0
    %p67 = por %p65, %p66
    %s69 = sadd.s32 %s68, 1
    %p72 = scmp.eq.s32.totalorder %s13, 1
    %p73 = scmp.ne.s32.totalorder %s68, %s70
    %p74 = scmp.eq.s32.totalorder %s13, 0
    %p75 = por %p73, %p74
    %p76 = scmp.ne.s32.totalorder %s68, %s70
    %p77 = scmp.eq.s32.totalorder %s18, 1
    %p78 = por %p76, %p77
    %p79 = scmp.ne.s32.totalorder %s70, %s71
    %p80 = scmp.eq.s32.totalorder %s18, 0
    %p81 = por %p79, %p80
    %p82 = scmp.ne.s32.totalorder %s70, %s71
    %p83 = scmp.eq.s32.totalorder %s19, 1
    %p84 = por %p82, %p83
    %p86 = scmp.ne.s32.totalorder %s71, %s85
    %p87 = scmp.eq.s32.totalorder %s19, 0
    %p88 = por %p86, %p87
    %s90 = sadd.s32 %s89, 1
    %p93 = scmp.eq.s32.totalorder %s13, 1
    %p94 = scmp.ne.s32.totalorder %s89, %s91
    %p95 = scmp.eq.s32.totalorder %s13, 0
    %p96 = por %p94, %p95
    %p97 = scmp.ne.s32.totalorder %s89, %s91
    %p98 = scmp.eq.s32.totalorder %s18, 1
    %p99 = por %p97, %p98
    %p100 = scmp.ne.s32.totalorder %s91, %s92
    %p101 = scmp.eq.s32.totalorder %s18, 0
    %p102 = por %p100, %p101
    %p103 = scmp.ne.s32.totalorder %s91, %s92
    %p104 = scmp.eq.s32.totalorder %s19, 1
    %p105 = por %p103, %p104
    %p107 = scmp.ne.s32.totalorder %s92, %s106
    %p108 = scmp.eq.s32.totalorder %s19, 0
    %p109 = por %p107, %p108
    %s111 = sadd.s32 %s110, 1
    %p114 = scmp.eq.s32.totalorder %s13, 1
    %p115 = scmp.ne.s32.totalorder %s110, %s112
    %p116 = scmp.eq.s32.totalorder %s13, 0
    %p117 = por %p115, %p116
    %p118 = scmp.ne.s32.totalorder %s110, %s112
    %p119 = scmp.eq.s32.totalorder %s18, 1
    %p120 = por %p118, %p119
    %p121 = scmp.ne.s32.totalorder %s112, %s113
    %p122 = scmp.eq.s32.totalorder %s18, 0
    %p123 = por %p121, %p122
    %p124 = scmp.ne.s32.totalorder %s112, %s113
    %p125 = scmp.eq.s32.totalorder %s19, 1
    %p126 = por %p124, %p125
    %p128 = scmp.ne.s32.totalorder %s113, %s127
    %p129 = scmp.eq.s32.totalorder %s19, 0
    %p130 = por %p128, %p129
    %s132 = sadd.s32 %s131, 1
    %p135 = scmp.eq.s32.totalorder %s13, 1
    %p136 = scmp.ne.s32.totalorder %s131, %s133
    %p137 = scmp.eq.s32.totalorder %s13, 0
    %p138 = por %p136, %p137
    %p139 = scmp.ne.s32.totalorder %s131, %s133
    %p140 = scmp.eq.s32.totalorder %s18, 1
    %p141 = por %p139, %p140
    %p142 = scmp.ne.s32.totalorder %s133, %s134
    %p143 = scmp.eq.s32.totalorder %s18, 0
    %p144 = por %p142, %p143
    %p145 = scmp.ne.s32.totalorder %s133, %s134
    %p146 = scmp.eq.s32.totalorder %s19, 1
    %p147 = por %p145, %p146
    %p149 = scmp.ne.s32.totalorder %s134, %s148
    %p150 = scmp.eq.s32.totalorder %s19, 0
    %p151 = por %p149, %p150
    %s153 = sadd.s32 %s152, 1
    %p156 = scmp.eq.s32.totalorder %s13, 1
    %p157 = scmp.ne.s32.totalorder %s152, %s154
    %p158 = scmp.eq.s32.totalorder %s13, 0
    %p159 = por %p157, %p158
    %p160 = scmp.ne.s32.totalorder %s152, %s154
    %p161 = scmp.eq.s32.totalorder %s18, 1
    %p162 = por %p160, %p161
    %p163 = scmp.ne.s32.totalorder %s154, %s155
    %p164 = scmp.eq.s32.totalorder %s18, 0
    %p165 = por %p163, %p164
    %p166 = scmp.ne.s32.totalorder %s154, %s155
    %p167 = scmp.eq.s32.totalorder %s19, 1
    %p168 = por %p166, %p167
    %p170 = scmp.ne.s32.totalorder %s155, %s169
    %p171 = scmp.eq.s32.totalorder %s19, 0
    %p172 = por %p170, %p171
    %s173 = ssub.s32 %s13, %s20
    %p174 = scmp.eq.s32.totalorder %s173, 0
    %s176 = sadd.s32 %s175, 1
    %s177 = scalar_select %p174, %s175, %s176
    %p180 = pneg %p174
    %p181 = scmp.eq.s32.totalorder %s13, 1
    %p182 = por %p180, %p181
    %p183 = scmp.ne.s32.totalorder %s175, %s178
    %p184 = scmp.eq.s32.totalorder %s13, 0
    %p185 = por %p183, %p184
    %p186 = scmp.ne.s32.totalorder %s175, %s178
    %p187 = scmp.eq.s32.totalorder %s18, 1
    %p188 = por %p186, %p187
    %p189 = scmp.ne.s32.totalorder %s178, %s179
    %p190 = scmp.eq.s32.totalorder %s18, 0
    %p191 = por %p189, %p190
    %p192 = scmp.ne.s32.totalorder %s178, %s179
    %p193 = scmp.eq.s32.totalorder %s19, 1
    %p194 = por %p192, %p193
    %p196 = scmp.ne.s32.totalorder %s179, %s195
    %p197 = scmp.eq.s32.totalorder %s19, 0
    %p198 = por %p196, %p197
    %p199 = scmp.le.s32.totalorder 1, %s13
    %p200 = scmp.lt.s32.totalorder %s13, 3
    %p201 = pnand %p199, %p200
    %p202 = pneg %p201
    // Predicated region
    $region9: #{tpu_custom_call.1} parent=5 // pred_check
      _
    $region10: #{tpu_custom_call.1} parent=5 // pred_check_branch
      %204 = sbr.rel (%p201) target = $region12
    $region11: #{tpu_custom_call.1} parent=5 // pred_region
      %s205 = ssub.s32 %s13, 1
      // Predicated region
      $region13: #{tpu_custom_call.1} parent=11 // pred_check
        %p206 = pneg %p60
      $region14: #{tpu_custom_call.1} parent=11 // pred_check_branch
        %208 = sbr.rel (%p206) target = $region16
      $region15: #{tpu_custom_call.1} parent=11 // pred_region
        _
      $region16: #{tpu_custom_call.1} parent=11 // pred_fallthru
        _
      // Predicated region
      $region17: #{tpu_custom_call.1} parent=11 // pred_check
        %p209 = pneg %p81
      $region18: #{tpu_custom_call.1} parent=11 // pred_check_branch
        %211 = sbr.rel (%p209) target = $region20
      $region19: #{tpu_custom_call.1} parent=11 // pred_region
        _
      $region20: #{tpu_custom_call.1} parent=11 // pred_fallthru
        _
      // Predicated region
      $region21: #{tpu_custom_call.1} parent=11 // pred_check
        %p212 = pneg %p102
      $region22: #{tpu_custom_call.1} parent=11 // pred_check_branch
        %214 = sbr.rel (%p212) target = $region24
      $region23: #{tpu_custom_call.1} parent=11 // pred_region
        _
      $region24: #{tpu_custom_call.1} parent=11 // pred_fallthru
        _
      // Predicated region
      $region25: #{tpu_custom_call.1} parent=11 // pred_check
        %p215 = pneg %p123
      $region26: #{tpu_custom_call.1} parent=11 // pred_check_branch
        %217 = sbr.rel (%p215) target = $region28
      $region27: #{tpu_custom_call.1} parent=11 // pred_region
        _
      $region28: #{tpu_custom_call.1} parent=11 // pred_fallthru
        _
      // Predicated region
      $region29: #{tpu_custom_call.1} parent=11 // pred_check
        %p218 = pneg %p144
      $region30: #{tpu_custom_call.1} parent=11 // pred_check_branch
        %220 = sbr.rel (%p218) target = $region32
      $region31: #{tpu_custom_call.1} parent=11 // pred_region
        _
      $region32: #{tpu_custom_call.1} parent=11 // pred_fallthru
        _
      // Predicated region
      $region33: #{tpu_custom_call.1} parent=11 // pred_check
        %p221 = pneg %p165
      $region34: #{tpu_custom_call.1} parent=11 // pred_check_branch
        %223 = sbr.rel (%p221) target = $region36
      $region35: #{tpu_custom_call.1} parent=11 // pred_region
        _
      $region36: #{tpu_custom_call.1} parent=11 // pred_fallthru
        _
    $region12: #{tpu_custom_call.1} parent=5 // pred_fallthru
      _
    %p224 = scmp.lt.s32.totalorder %s13, 2
    // Predicated region
    $region37: #{tpu_custom_call.1} parent=5 // pred_check
      %p225 = pneg %p224
    $region38: #{tpu_custom_call.1} parent=5 // pred_check_branch
      %227 = sbr.rel (%p225) target = $region40
    $region39: #{tpu_custom_call.1} parent=5 // pred_region
      // Predicated region
      $region41: #{tpu_custom_call.1} parent=39 // pred_check
        %p228 = pneg %p33
      $region42: #{tpu_custom_call.1} parent=39 // pred_check_branch
        %230 = sbr.rel (%p228) target = $region44
      $region43: #{tpu_custom_call.1} parent=39 // pred_region
        %s231 = smul.u32 32, %s13
        %p232 = scmp.lt.s32.totalorder %s231, 63
        %s233 = scalar_select %p232, %s231, 63
        %s234 = smul.addr %s233, 8
        %s235 = scalar_lea.vmem %s0, %s234
        %s236 = smul.u32 32, %s13
      $region44: #{tpu_custom_call.1} parent=39 // pred_fallthru
        _
    $region40: #{tpu_custom_call.1} parent=5 // pred_fallthru
      _
    %p237 = scmp.le.s32.totalorder 1, %s13
    %p238 = scmp.lt.s32.totalorder %s13, 3
    %p239 = pnand %p237, %p238
    %p240 = pneg %p239
    // Predicated region
    $region45: #{tpu_custom_call.1} parent=5 // pred_check
      _
    $region46: #{tpu_custom_call.1} parent=5 // pred_check_branch
      %242 = sbr.rel (%p239) target = $region48
    $region47: #{tpu_custom_call.1} parent=5 // pred_region
      %s243 = ssub.s32 %s13, 1
      %s244 = smul.u32 32, %s18
      %p245 = scmp.lt.s32.totalorder %s244, 63
      %s246 = scalar_select %p245, %s244, 63
      %s247 = smul.addr %s246, 8
      %s248 = scalar_lea.vmem %s0, %s247
      %p249 = pneg %p39
      %p250 = pneg %p36
      %p251 = pneg %p60
      %p252 = pneg %p57
      %p253 = pneg %p81
      %p254 = pneg %p78
      %p255 = pneg %p102
      %p256 = pneg %p99
      %p257 = pneg %p123
      %p258 = pneg %p120
      %p259 = pneg %p144
      %p260 = pneg %p141
      %p261 = pneg %p165
      %p262 = pneg %p162
      %p263 = pneg %p191
      %p264 = pneg %p188
      %s265 = smul.u32 32, %s18
      %p266 = scmp.lt.s32.totalorder %s265, 63
      %s267 = scalar_select %p266, %s265, 63
      %s268 = smul.addr %s267, 8
      %s269 = scalar_lea.vmem %s7, %s268
      %s270 = smul.u32 32, %s18
      %p271 = scmp.lt.s32.totalorder %s270, 63
      %s272 = scalar_select %p271, %s270, 63
      %s273 = smul.addr %s272, 8
      %s274 = scalar_lea.vmem %s0, %s273
      %s275 = smul.u32 32, %s18
      %s276 = smul.u32 32, %s18
      %p277 = scmp.lt.s32.totalorder %s276, 63
      %s278 = scalar_select %p277, %s276, 63
      %s279 = smul.addr %s278, 8
      %s280 = scalar_lea.vmem %s7, %s279
      %s281 = smul.u32 32, %s18
      %v282 = vld [vmem:[%s274] sm:$0xff]
      %v283 = vld [vmem:[%s274 + $0x8] sm:$0xff]
      %v284 = vld [vmem:[%s274 + $0x10] sm:$0xff]
      %v285 = vld [vmem:[%s274 + $0x18] sm:$0xff]
      %v286 = vld [vmem:[%s274 + $0x20] sm:$0xff]
      %v287 = vld [vmem:[%s274 + $0x28] sm:$0xff]
      %v288 = vld [vmem:[%s274 + $0x30] sm:$0xff]
      %v289 = vld [vmem:[%s274 + $0x38] sm:$0xff]
      %v290 = vld [vmem:[%s274 + $0x40] sm:$0xff]
      %v291 = vld [vmem:[%s274 + $0x48] sm:$0xff]
      %v292 = vld [vmem:[%s274 + $0x50] sm:$0xff]
      %v293 = vld [vmem:[%s274 + $0x58] sm:$0xff]
      %v294 = vld [vmem:[%s274 + $0x60] sm:$0xff]
      %v295 = vld [vmem:[%s274 + $0x68] sm:$0xff]
      %v296 = vld [vmem:[%s274 + $0x70] sm:$0xff]
      %v297 = vld [vmem:[%s274 + $0x78] sm:$0xff]
      %v298 = vld [vmem:[%s274 + $0x80] sm:$0xff]
      %v299 = vld [vmem:[%s274 + $0x88] sm:$0xff]
      %v300 = vld [vmem:[%s274 + $0x90] sm:$0xff]
      %v301 = vld [vmem:[%s274 + $0x98] sm:$0xff]
      %v302 = vld [vmem:[%s274 + $0xa0] sm:$0xff]
      %v303 = vld [vmem:[%s274 + $0xa8] sm:$0xff]
      %v304 = vld [vmem:[%s274 + $0xb0] sm:$0xff]
      %v305 = vld [vmem:[%s274 + $0xb8] sm:$0xff]
      %v306 = vld [vmem:[%s274 + $0xc0] sm:$0xff]
      %v307 = vld [vmem:[%s274 + $0xc8] sm:$0xff]
      %v308 = vld [vmem:[%s274 + $0xd0] sm:$0xff]
      %v309 = vld [vmem:[%s274 + $0xd8] sm:$0xff]
      %v310 = vld [vmem:[%s274 + $0xe0] sm:$0xff]
      %v311 = vld [vmem:[%s274 + $0xe8] sm:$0xff]
      %v312 = vld [vmem:[%s274 + $0xf0] sm:$0xff]
      %v313 = vld [vmem:[%s274 + $0xf8] sm:$0xff]
      %v314 = vld [vmem:[%s1] sm:$0xff]
      %v315 = vld [vmem:[%s1 + $0x8] sm:$0xff]
      %v316 = vld [vmem:[%s1 + $0x10] sm:$0xff]
      %v317 = vld [vmem:[%s1 + $0x18] sm:$0xff]
      %v318 = vld [vmem:[%s2] sm:$0x1]
      %v320 = vlaneseq
      %v321 = vshrl.u32 %v320, 7
      %v322 = vsub.s32 0, %v321
      %v323 = vrot.slane %v318, %v322
      %vm325 = vcmask 261120
      %v327 = vsel %vm325, %v282, 0
      %v330 = vsel %vm325, %v283, 0
      %v333 = vsel %vm325, %v284, 0
      %v336 = vsel %vm325, %v285, 0
      %v339 = vsel %vm325, %v286, 0
      %v342 = vsel %vm325, %v287, 0
      %v345 = vsel %vm325, %v288, 0
      %v348 = vsel %vm325, %v289, 0
      %v351 = vsel %vm325, %v290, 0
      %v354 = vsel %vm325, %v291, 0
      %v357 = vsel %vm325, %v292, 0
      %v360 = vsel %vm325, %v293, 0
      %v363 = vsel %vm325, %v294, 0
      %v366 = vsel %vm325, %v295, 0
      %v369 = vsel %vm325, %v296, 0
      %v372 = vsel %vm325, %v297, 0
      %v375 = vsel %vm325, %v298, 0
      %v378 = vsel %vm325, %v299, 0
      %v381 = vsel %vm325, %v300, 0
      %v384 = vsel %vm325, %v301, 0
      %v387 = vsel %vm325, %v302, 0
      %v390 = vsel %vm325, %v303, 0
      %v393 = vsel %vm325, %v304, 0
      %v396 = vsel %vm325, %v305, 0
      %v399 = vsel %vm325, %v306, 0
      %v402 = vsel %vm325, %v307, 0
      %v405 = vsel %vm325, %v308, 0
      %v408 = vsel %vm325, %v309, 0
      %v411 = vsel %vm325, %v310, 0
      %v414 = vsel %vm325, %v311, 0
      %v417 = vsel %vm325, %v312, 0
      %v420 = vsel %vm325, %v313, 0
      %422 = vmatprep.subr.mxu0 0.0
      %423 = vmatpush1.msra.mxu0 0.0
      %424 = vmatprep.subr.mxu0 0.0
      %425 = vmatpush1.msra.mxu0 0.0
      %426 = vmatprep.subr.mxu0 0.0
      %427 = vmatpush1.msra.mxu0 0.0
      %428 = vmatprep.subr.mxu0 0.0
      %429 = vmatpush1.msra.mxu0 0.0
      %430 = vmatprep.subr.mxu0 0.0
      %431 = vmatpush1.msra.mxu0 0.0
      %432 = vmatprep.subr.mxu0 0.0
      %433 = vmatpush1.msra.mxu0 0.0
      %434 = vmatprep.subr.mxu0 0.0
      %435 = vmatpush1.msra.mxu0 0.0
      %436 = vmatprep.subr.mxu0 0.0
      %437 = vmatpush1.msra.mxu0 0.0
      %438 = vmatprep.subr.mxu0 0.0
      %439 = vmatpush1.msra.mxu0 0.0
      %440 = vmatprep.subr.mxu0 0.0
      %441 = vmatpush1.msra.mxu0 0.0
      %442 = vmatprep.subr.mxu0 0.0
      %443 = vmatpush1.msra.mxu0 0.0
      %444 = vmatprep.subr.mxu0 0.0
      %445 = vmatpush1.msra.mxu0 0.0
      %446 = vmatprep.subr.mxu0 0.0
      %447 = vmatpush1.msra.mxu0 %v317
      %448 = vmatprep.subr.mxu0 0.0
      %449 = vmatpush1.msra.mxu0 %v316
      %450 = vmatprep.subr.mxu0 0.0
      %451 = vmatpush1.msra.mxu0 %v315
      %452 = vmatprep.subr.mxu0 0.0
      %453 = vmatpush1.msra.mxu0 %v314
      %454 = vmatprep.subr.mxu0 0.0
      %455 = vmatpush2.msra.mxu0 0.0
      %456 = vmatprep.subr.mxu0 0.0
      %457 = vmatpush2.msra.mxu0 0.0
      %458 = vmatprep.subr.mxu0 0.0
      %459 = vmatpush2.msra.mxu0 0.0
      %460 = vmatprep.subr.mxu0 0.0
      %461 = vmatpush2.msra.mxu0 0.0
      %462 = vmatprep.subr.mxu0 0.0
      %463 = vmatpush2.msra.mxu0 0.0
      %464 = vmatprep.subr.mxu0 0.0
      %465 = vmatpush2.msra.mxu0 0.0
      %466 = vmatprep.subr.mxu0 0.0
      %467 = vmatpush2.msra.mxu0 0.0
      %468 = vmatprep.subr.mxu0 0.0
      %469 = vmatpush2.msra.mxu0 0.0
      %470 = vmatprep.subr.mxu0 0.0
      %471 = vmatpush2.msra.mxu0 0.0
      %472 = vmatprep.subr.mxu0 0.0
      %473 = vmatpush2.msra.mxu0 0.0
      %474 = vmatprep.subr.mxu0 0.0
      %475 = vmatpush2.msra.mxu0 0.0
      %476 = vmatprep.subr.mxu0 0.0
      %477 = vmatpush2.msra.mxu0 0.0
      %478 = vmatprep.subr.mxu0 0.0
      %479 = vmatpush2.msra.mxu0 0.0
      %480 = vmatprep.subr.mxu0 0.0
      %481 = vmatpush2.msra.mxu0 0.0
      %482 = vmatprep.subr.mxu0 0.0
      %483 = vmatpush2.msra.mxu0 0.0
      %484 = vmatprep.subr.mxu0 0.0
      %485 = vmatpush2.msra.mxu0 0.0
      %486 = vmatprep.mubr.f32.mxu0 0.0
      %487 = vmatmul.mubr.f32.gmra.mxu0 %v327
      %v488 = vpop.f32.mrf.mxu0
      %v489 = vadd.f32 %v323, %v488
      %v490 = vpop.f32.mrf.mxu0
      %491 = vmatprep.mubr.f32.mxu0 0.0
      %492 = vmatmul.mubr.f32.gmra.mxu0 %v330
      %v493 = vpop.f32.mrf.mxu0
      %v494 = vadd.f32 %v323, %v493
      %v495 = vpop.f32.mrf.mxu0
      %496 = vmatprep.mubr.f32.mxu0 0.0
      %497 = vmatmul.mubr.f32.gmra.mxu0 %v333
      %v498 = vpop.f32.mrf.mxu0
      %v499 = vadd.f32 %v323, %v498
      %v500 = vpop.f32.mrf.mxu0
      %501 = vmatprep.mubr.f32.mxu0 0.0
      %502 = vmatmul.mubr.f32.gmra.mxu0 %v336
      %v503 = vpop.f32.mrf.mxu0
      %v504 = vadd.f32 %v323, %v503
      %v505 = vpop.f32.mrf.mxu0
      %506 = vmatprep.mubr.f32.mxu0 0.0
      %507 = vmatmul.mubr.f32.gmra.mxu0 %v339
      %v508 = vpop.f32.mrf.mxu0
      %v509 = vadd.f32 %v323, %v508
      %v510 = vpop.f32.mrf.mxu0
      %511 = vmatprep.mubr.f32.mxu0 0.0
      %512 = vmatmul.mubr.f32.gmra.mxu0 %v342
      %v513 = vpop.f32.mrf.mxu0
      %v514 = vadd.f32 %v323, %v513
      %v515 = vpop.f32.mrf.mxu0
      %516 = vmatprep.mubr.f32.mxu0 0.0
      %517 = vmatmul.mubr.f32.gmra.mxu0 %v345
      %v518 = vpop.f32.mrf.mxu0
      %v519 = vadd.f32 %v323, %v518
      %v520 = vpop.f32.mrf.mxu0
      %521 = vmatprep.mubr.f32.mxu0 0.0
      %522 = vmatmul.mubr.f32.gmra.mxu0 %v348
      %v523 = vpop.f32.mrf.mxu0
      %v524 = vadd.f32 %v323, %v523
      %v525 = vpop.f32.mrf.mxu0
      %526 = vmatprep.mubr.f32.mxu0 0.0
      %527 = vmatmul.mubr.f32.gmra.mxu0 %v351
      %v528 = vpop.f32.mrf.mxu0
      %v529 = vadd.f32 %v323, %v528
      %v530 = vpop.f32.mrf.mxu0
      %531 = vmatprep.mubr.f32.mxu0 0.0
      %532 = vmatmul.mubr.f32.gmra.mxu0 %v354
      %v533 = vpop.f32.mrf.mxu0
      %v534 = vadd.f32 %v323, %v533
      %v535 = vpop.f32.mrf.mxu0
      %536 = vmatprep.mubr.f32.mxu0 0.0
      %537 = vmatmul.mubr.f32.gmra.mxu0 %v357
      %v538 = vpop.f32.mrf.mxu0
      %v539 = vadd.f32 %v323, %v538
      %v540 = vpop.f32.mrf.mxu0
      %541 = vmatprep.mubr.f32.mxu0 0.0
      %542 = vmatmul.mubr.f32.gmra.mxu0 %v360
      %v543 = vpop.f32.mrf.mxu0
      %v544 = vadd.f32 %v323, %v543
      %v545 = vpop.f32.mrf.mxu0
      %546 = vmatprep.mubr.f32.mxu0 0.0
      %547 = vmatmul.mubr.f32.gmra.mxu0 %v363
      %v548 = vpop.f32.mrf.mxu0
      %v549 = vadd.f32 %v323, %v548
      %v550 = vpop.f32.mrf.mxu0
      %551 = vmatprep.mubr.f32.mxu0 0.0
      %552 = vmatmul.mubr.f32.gmra.mxu0 %v366
      %v553 = vpop.f32.mrf.mxu0
      %v554 = vadd.f32 %v323, %v553
      %v555 = vpop.f32.mrf.mxu0
      %556 = vmatprep.mubr.f32.mxu0 0.0
      %557 = vmatmul.mubr.f32.gmra.mxu0 %v369
      %v558 = vpop.f32.mrf.mxu0
      %v559 = vadd.f32 %v323, %v558
      %v560 = vpop.f32.mrf.mxu0
      %561 = vmatprep.mubr.f32.mxu0 0.0
      %562 = vmatmul.mubr.f32.gmra.mxu0 %v372
      %v563 = vpop.f32.mrf.mxu0
      %v564 = vadd.f32 %v323, %v563
      %v565 = vpop.f32.mrf.mxu0
      %566 = vmatprep.mubr.f32.mxu0 0.0
      %567 = vmatmul.mubr.f32.gmra.mxu0 %v375
      %v568 = vpop.f32.mrf.mxu0
      %v569 = vadd.f32 %v323, %v568
      %v570 = vpop.f32.mrf.mxu0
      %571 = vmatprep.mubr.f32.mxu0 0.0
      %572 = vmatmul.mubr.f32.gmra.mxu0 %v378
      %v573 = vpop.f32.mrf.mxu0
      %v574 = vadd.f32 %v323, %v573
      %v575 = vpop.f32.mrf.mxu0
      %576 = vmatprep.mubr.f32.mxu0 0.0
      %577 = vmatmul.mubr.f32.gmra.mxu0 %v381
      %v578 = vpop.f32.mrf.mxu0
      %v579 = vadd.f32 %v323, %v578
      %v580 = vpop.f32.mrf.mxu0
      %581 = vmatprep.mubr.f32.mxu0 0.0
      %582 = vmatmul.mubr.f32.gmra.mxu0 %v384
      %v583 = vpop.f32.mrf.mxu0
      %v584 = vadd.f32 %v323, %v583
      %v585 = vpop.f32.mrf.mxu0
      %586 = vmatprep.mubr.f32.mxu0 0.0
      %587 = vmatmul.mubr.f32.gmra.mxu0 %v387
      %v588 = vpop.f32.mrf.mxu0
      %v589 = vadd.f32 %v323, %v588
      %v590 = vpop.f32.mrf.mxu0
      %591 = vmatprep.mubr.f32.mxu0 0.0
      %592 = vmatmul.mubr.f32.gmra.mxu0 %v390
      %v593 = vpop.f32.mrf.mxu0
      %v594 = vadd.f32 %v323, %v593
      %v595 = vpop.f32.mrf.mxu0
      %596 = vmatprep.mubr.f32.mxu0 0.0
      %597 = vmatmul.mubr.f32.gmra.mxu0 %v393
      %v598 = vpop.f32.mrf.mxu0
      %v599 = vadd.f32 %v323, %v598
      %v600 = vpop.f32.mrf.mxu0
      %601 = vmatprep.mubr.f32.mxu0 0.0
      %602 = vmatmul.mubr.f32.gmra.mxu0 %v396
      %v603 = vpop.f32.mrf.mxu0
      %v604 = vadd.f32 %v323, %v603
      %v605 = vpop.f32.mrf.mxu0
      %606 = vmatprep.mubr.f32.mxu0 0.0
      %607 = vmatmul.mubr.f32.gmra.mxu0 %v399
      %v608 = vpop.f32.mrf.mxu0
      %v609 = vadd.f32 %v323, %v608
      %v610 = vpop.f32.mrf.mxu0
      %611 = vmatprep.mubr.f32.mxu0 0.0
      %612 = vmatmul.mubr.f32.gmra.mxu0 %v402
      %v613 = vpop.f32.mrf.mxu0
      %v614 = vadd.f32 %v323, %v613
      %v615 = vpop.f32.mrf.mxu0
      %616 = vmatprep.mubr.f32.mxu0 0.0
      %617 = vmatmul.mubr.f32.gmra.mxu0 %v405
      %v618 = vpop.f32.mrf.mxu0
      %v619 = vadd.f32 %v323, %v618
      %v620 = vpop.f32.mrf.mxu0
      %621 = vmatprep.mubr.f32.mxu0 0.0
      %622 = vmatmul.mubr.f32.gmra.mxu0 %v408
      %v623 = vpop.f32.mrf.mxu0
      %v624 = vadd.f32 %v323, %v623
      %v625 = vpop.f32.mrf.mxu0
      %626 = vmatprep.mubr.f32.mxu0 0.0
      %627 = vmatmul.mubr.f32.gmra.mxu0 %v411
      %v628 = vpop.f32.mrf.mxu0
      %v629 = vadd.f32 %v323, %v628
      %v630 = vpop.f32.mrf.mxu0
      %631 = vmatprep.mubr.f32.mxu0 0.0
      %632 = vmatmul.mubr.f32.gmra.mxu0 %v414
      %v633 = vpop.f32.mrf.mxu0
      %v634 = vadd.f32 %v323, %v633
      %v635 = vpop.f32.mrf.mxu0
      %636 = vmatprep.mubr.f32.mxu0 0.0
      %637 = vmatmul.mubr.f32.gmra.mxu0 %v417
      %v638 = vpop.f32.mrf.mxu0
      %v639 = vadd.f32 %v323, %v638
      %v640 = vpop.f32.mrf.mxu0
      %641 = vmatprep.mubr.f32.mxu0 0.0
      %642 = vmatmul.mubr.f32.gmra.mxu0 %v420
      %v643 = vpop.f32.mrf.mxu0
      %v644 = vadd.f32 %v323, %v643
      %v645 = vpop.f32.mrf.mxu0
      %646 = vdwg.mxu0
      %v647 = vmul.f32 %v489, 0.18181819
      %v648 = vmul.f32 %v494, 0.18181819
      %v649 = vmul.f32 %v499, 0.18181819
      %v650 = vmul.f32 %v504, 0.18181819
      %v651 = vmul.f32 %v509, 0.18181819
      %v652 = vmul.f32 %v514, 0.18181819
      %v653 = vmul.f32 %v519, 0.18181819
      %v654 = vmul.f32 %v524, 0.18181819
      %v655 = vmul.f32 %v529, 0.18181819
      %v656 = vmul.f32 %v534, 0.18181819
      %v657 = vmul.f32 %v539, 0.18181819
      %v658 = vmul.f32 %v544, 0.18181819
      %v659 = vmul.f32 %v549, 0.18181819
      %v660 = vmul.f32 %v554, 0.18181819
      %v661 = vmul.f32 %v559, 0.18181819
      %v662 = vmul.f32 %v564, 0.18181819
      %v663 = vmul.f32 %v569, 0.18181819
      %v664 = vmul.f32 %v574, 0.18181819
      %v665 = vmul.f32 %v579, 0.18181819
      %v666 = vmul.f32 %v584, 0.18181819
      %v667 = vmul.f32 %v589, 0.18181819
      %v668 = vmul.f32 %v594, 0.18181819
      %v669 = vmul.f32 %v599, 0.18181819
      %v670 = vmul.f32 %v604, 0.18181819
      %v671 = vmul.f32 %v609, 0.18181819
      %v672 = vmul.f32 %v614, 0.18181819
      %v673 = vmul.f32 %v619, 0.18181819
      %v674 = vmul.f32 %v624, 0.18181819
      %v675 = vmul.f32 %v629, 0.18181819
      %v676 = vmul.f32 %v634, 0.18181819
      %v677 = vmul.f32 %v639, 0.18181819
      %v678 = vmul.f32 %v644, 0.18181819
      %v679 = vmax.f32 %v489, %v647
      %v680 = vmax.f32 %v494, %v648
      %v681 = vmax.f32 %v499, %v649
      %v682 = vmax.f32 %v504, %v650
      %v683 = vmax.f32 %v509, %v651
      %v684 = vmax.f32 %v514, %v652
      %v685 = vmax.f32 %v519, %v653
      %v686 = vmax.f32 %v524, %v654
      %v687 = vmax.f32 %v529, %v655
      %v688 = vmax.f32 %v534, %v656
      %v689 = vmax.f32 %v539, %v657
      %v690 = vmax.f32 %v544, %v658
      %v691 = vmax.f32 %v549, %v659
      %v692 = vmax.f32 %v554, %v660
      %v693 = vmax.f32 %v559, %v661
      %v694 = vmax.f32 %v564, %v662
      %v695 = vmax.f32 %v569, %v663
      %v696 = vmax.f32 %v574, %v664
      %v697 = vmax.f32 %v579, %v665
      %v698 = vmax.f32 %v584, %v666
      %v699 = vmax.f32 %v589, %v667
      %v700 = vmax.f32 %v594, %v668
      %v701 = vmax.f32 %v599, %v669
      %v702 = vmax.f32 %v604, %v670
      %v703 = vmax.f32 %v609, %v671
      %v704 = vmax.f32 %v614, %v672
      %v705 = vmax.f32 %v619, %v673
      %v706 = vmax.f32 %v624, %v674
      %v707 = vmax.f32 %v629, %v675
      %v708 = vmax.f32 %v634, %v676
      %v709 = vmax.f32 %v639, %v677
      %v710 = vmax.f32 %v644, %v678
      %v711 = vld [vmem:[%s3] sm:$0xff]
      %v712 = vld [vmem:[%s3 + $0x8] sm:$0xff]
      %v713 = vld [vmem:[%s3 + $0x10] sm:$0xff]
      %v714 = vld [vmem:[%s3 + $0x18] sm:$0xff]
      %v715 = vld [vmem:[%s3 + $0x20] sm:$0xff]
      %v716 = vld [vmem:[%s3 + $0x28] sm:$0xff]
      %v717 = vld [vmem:[%s3 + $0x30] sm:$0xff]
      %v718 = vld [vmem:[%s3 + $0x38] sm:$0xff]
      %v719 = vld [vmem:[%s3 + $0x40] sm:$0xff]
      %v720 = vld [vmem:[%s3 + $0x48] sm:$0xff]
      %v721 = vld [vmem:[%s3 + $0x50] sm:$0xff]
      %v722 = vld [vmem:[%s3 + $0x58] sm:$0xff]
      %v723 = vld [vmem:[%s3 + $0x60] sm:$0xff]
      %v724 = vld [vmem:[%s3 + $0x68] sm:$0xff]
      %v725 = vld [vmem:[%s3 + $0x70] sm:$0xff]
      %v726 = vld [vmem:[%s3 + $0x78] sm:$0xff]
      %v727 = vld [vmem:[%s4] sm:$0x1]
      %v729 = vlaneseq
      %v730 = vshrl.u32 %v729, 7
      %v731 = vsub.s32 0, %v730
      %v732 = vrot.slane %v727, %v731
      %734 = vmatprep.subr.mxu0 0.0
      %735 = vmatpush1.msra.mxu0 %v726
      %736 = vmatprep.subr.mxu0 0.0
      %737 = vmatpush1.msra.mxu0 %v725
      %738 = vmatprep.subr.mxu0 0.0
      %739 = vmatpush1.msra.mxu0 %v724
      %740 = vmatprep.subr.mxu0 0.0
      %741 = vmatpush1.msra.mxu0 %v723
      %742 = vmatprep.subr.mxu0 0.0
      %743 = vmatpush1.msra.mxu0 %v722
      %744 = vmatprep.subr.mxu0 0.0
      %745 = vmatpush1.msra.mxu0 %v721
      %746 = vmatprep.subr.mxu0 0.0
      %747 = vmatpush1.msra.mxu0 %v720
      %748 = vmatprep.subr.mxu0 0.0
      %749 = vmatpush1.msra.mxu0 %v719
      %750 = vmatprep.subr.mxu0 0.0
      %751 = vmatpush1.msra.mxu0 %v718
      %752 = vmatprep.subr.mxu0 0.0
      %753 = vmatpush1.msra.mxu0 %v717
      %754 = vmatprep.subr.mxu0 0.0
      %755 = vmatpush1.msra.mxu0 %v716
      %756 = vmatprep.subr.mxu0 0.0
      %757 = vmatpush1.msra.mxu0 %v715
      %758 = vmatprep.subr.mxu0 0.0
      %759 = vmatpush1.msra.mxu0 %v714
      %760 = vmatprep.subr.mxu0 0.0
      %761 = vmatpush1.msra.mxu0 %v713
      %762 = vmatprep.subr.mxu0 0.0
      %763 = vmatpush1.msra.mxu0 %v712
      %764 = vmatprep.subr.mxu0 0.0
      %765 = vmatpush1.msra.mxu0 %v711
      %766 = vmatprep.subr.mxu0 0.0
      %767 = vmatpush2.msra.mxu0 0.0
      %768 = vmatprep.subr.mxu0 0.0
      %769 = vmatpush2.msra.mxu0 0.0
      %770 = vmatprep.subr.mxu0 0.0
      %771 = vmatpush2.msra.mxu0 0.0
      %772 = vmatprep.subr.mxu0 0.0
      %773 = vmatpush2.msra.mxu0 0.0
      %774 = vmatprep.subr.mxu0 0.0
      %775 = vmatpush2.msra.mxu0 0.0
      %776 = vmatprep.subr.mxu0 0.0
      %777 = vmatpush2.msra.mxu0 0.0
      %778 = vmatprep.subr.mxu0 0.0
      %779 = vmatpush2.msra.mxu0 0.0
      %780 = vmatprep.subr.mxu0 0.0
      %781 = vmatpush2.msra.mxu0 0.0
      %782 = vmatprep.subr.mxu0 0.0
      %783 = vmatpush2.msra.mxu0 0.0
      %784 = vmatprep.subr.mxu0 0.0
      %785 = vmatpush2.msra.mxu0 0.0
      %786 = vmatprep.subr.mxu0 0.0
      %787 = vmatpush2.msra.mxu0 0.0
      %788 = vmatprep.subr.mxu0 0.0
      %789 = vmatpush2.msra.mxu0 0.0
      %790 = vmatprep.subr.mxu0 0.0
      %791 = vmatpush2.msra.mxu0 0.0
      %792 = vmatprep.subr.mxu0 0.0
      %793 = vmatpush2.msra.mxu0 0.0
      %794 = vmatprep.subr.mxu0 0.0
      %795 = vmatpush2.msra.mxu0 0.0
      %796 = vmatprep.subr.mxu0 0.0
      %797 = vmatpush2.msra.mxu0 0.0
      %798 = vmatprep.mubr.f32.mxu0 0.0
      %799 = vmatmul.mubr.f32.gmra.mxu0 %v679
      %v800 = vpop.f32.mrf.mxu0
      %v801 = vadd.f32 %v732, %v800
      %v802 = vpop.f32.mrf.mxu0
      %803 = vmatprep.mubr.f32.mxu0 0.0
      %804 = vmatmul.mubr.f32.gmra.mxu0 %v680
      %v805 = vpop.f32.mrf.mxu0
      %v806 = vadd.f32 %v732, %v805
      %v807 = vpop.f32.mrf.mxu0
      %808 = vmatprep.mubr.f32.mxu0 0.0
      %809 = vmatmul.mubr.f32.gmra.mxu0 %v681
      %v810 = vpop.f32.mrf.mxu0
      %v811 = vadd.f32 %v732, %v810
      %v812 = vpop.f32.mrf.mxu0
      %813 = vmatprep.mubr.f32.mxu0 0.0
      %814 = vmatmul.mubr.f32.gmra.mxu0 %v682
      %v815 = vpop.f32.mrf.mxu0
      %v816 = vadd.f32 %v732, %v815
      %v817 = vpop.f32.mrf.mxu0
      %818 = vmatprep.mubr.f32.mxu0 0.0
      %819 = vmatmul.mubr.f32.gmra.mxu0 %v683
      %v820 = vpop.f32.mrf.mxu0
      %v821 = vadd.f32 %v732, %v820
      %v822 = vpop.f32.mrf.mxu0
      %823 = vmatprep.mubr.f32.mxu0 0.0
      %824 = vmatmul.mubr.f32.gmra.mxu0 %v684
      %v825 = vpop.f32.mrf.mxu0
      %v826 = vadd.f32 %v732, %v825
      %v827 = vpop.f32.mrf.mxu0
      %828 = vmatprep.mubr.f32.mxu0 0.0
      %829 = vmatmul.mubr.f32.gmra.mxu0 %v685
      %v830 = vpop.f32.mrf.mxu0
      %v831 = vadd.f32 %v732, %v830
      %v832 = vpop.f32.mrf.mxu0
      %833 = vmatprep.mubr.f32.mxu0 0.0
      %834 = vmatmul.mubr.f32.gmra.mxu0 %v686
      %v835 = vpop.f32.mrf.mxu0
      %v836 = vadd.f32 %v732, %v835
      %v837 = vpop.f32.mrf.mxu0
      %838 = vmatprep.mubr.f32.mxu0 0.0
      %839 = vmatmul.mubr.f32.gmra.mxu0 %v687
      %v840 = vpop.f32.mrf.mxu0
      %v841 = vadd.f32 %v732, %v840
      %v842 = vpop.f32.mrf.mxu0
      %843 = vmatprep.mubr.f32.mxu0 0.0
      %844 = vmatmul.mubr.f32.gmra.mxu0 %v688
      %v845 = vpop.f32.mrf.mxu0
      %v846 = vadd.f32 %v732, %v845
      %v847 = vpop.f32.mrf.mxu0
      %848 = vmatprep.mubr.f32.mxu0 0.0
      %849 = vmatmul.mubr.f32.gmra.mxu0 %v689
      %v850 = vpop.f32.mrf.mxu0
      %v851 = vadd.f32 %v732, %v850
      %v852 = vpop.f32.mrf.mxu0
      %853 = vmatprep.mubr.f32.mxu0 0.0
      %854 = vmatmul.mubr.f32.gmra.mxu0 %v690
      %v855 = vpop.f32.mrf.mxu0
      %v856 = vadd.f32 %v732, %v855
      %v857 = vpop.f32.mrf.mxu0
      %858 = vmatprep.mubr.f32.mxu0 0.0
      %859 = vmatmul.mubr.f32.gmra.mxu0 %v691
      %v860 = vpop.f32.mrf.mxu0
      %v861 = vadd.f32 %v732, %v860
      %v862 = vpop.f32.mrf.mxu0
      %863 = vmatprep.mubr.f32.mxu0 0.0
      %864 = vmatmul.mubr.f32.gmra.mxu0 %v692
      %v865 = vpop.f32.mrf.mxu0
      %v866 = vadd.f32 %v732, %v865
      %v867 = vpop.f32.mrf.mxu0
      %868 = vmatprep.mubr.f32.mxu0 0.0
      %869 = vmatmul.mubr.f32.gmra.mxu0 %v693
      %v870 = vpop.f32.mrf.mxu0
      %v871 = vadd.f32 %v732, %v870
      %v872 = vpop.f32.mrf.mxu0
      %873 = vmatprep.mubr.f32.mxu0 0.0
      %874 = vmatmul.mubr.f32.gmra.mxu0 %v694
      %v875 = vpop.f32.mrf.mxu0
      %v876 = vadd.f32 %v732, %v875
      %v877 = vpop.f32.mrf.mxu0
      %878 = vmatprep.mubr.f32.mxu0 0.0
      %879 = vmatmul.mubr.f32.gmra.mxu0 %v695
      %v880 = vpop.f32.mrf.mxu0
      %v881 = vadd.f32 %v732, %v880
      %v882 = vpop.f32.mrf.mxu0
      %883 = vmatprep.mubr.f32.mxu0 0.0
      %884 = vmatmul.mubr.f32.gmra.mxu0 %v696
      %v885 = vpop.f32.mrf.mxu0
      %v886 = vadd.f32 %v732, %v885
      %v887 = vpop.f32.mrf.mxu0
      %888 = vmatprep.mubr.f32.mxu0 0.0
      %889 = vmatmul.mubr.f32.gmra.mxu0 %v697
      %v890 = vpop.f32.mrf.mxu0
      %v891 = vadd.f32 %v732, %v890
      %v892 = vpop.f32.mrf.mxu0
      %893 = vmatprep.mubr.f32.mxu0 0.0
      %894 = vmatmul.mubr.f32.gmra.mxu0 %v698
      %v895 = vpop.f32.mrf.mxu0
      %v896 = vadd.f32 %v732, %v895
      %v897 = vpop.f32.mrf.mxu0
      %898 = vmatprep.mubr.f32.mxu0 0.0
      %899 = vmatmul.mubr.f32.gmra.mxu0 %v699
      %v900 = vpop.f32.mrf.mxu0
      %v901 = vadd.f32 %v732, %v900
      %v902 = vpop.f32.mrf.mxu0
      %903 = vmatprep.mubr.f32.mxu0 0.0
      %904 = vmatmul.mubr.f32.gmra.mxu0 %v700
      %v905 = vpop.f32.mrf.mxu0
      %v906 = vadd.f32 %v732, %v905
      %v907 = vpop.f32.mrf.mxu0
      %908 = vmatprep.mubr.f32.mxu0 0.0
      %909 = vmatmul.mubr.f32.gmra.mxu0 %v701
      %v910 = vpop.f32.mrf.mxu0
      %v911 = vadd.f32 %v732, %v910
      %v912 = vpop.f32.mrf.mxu0
      %913 = vmatprep.mubr.f32.mxu0 0.0
      %914 = vmatmul.mubr.f32.gmra.mxu0 %v702
      %v915 = vpop.f32.mrf.mxu0
      %v916 = vadd.f32 %v732, %v915
      %v917 = vpop.f32.mrf.mxu0
      %918 = vmatprep.mubr.f32.mxu0 0.0
      %919 = vmatmul.mubr.f32.gmra.mxu0 %v703
      %v920 = vpop.f32.mrf.mxu0
      %v921 = vadd.f32 %v732, %v920
      %v922 = vpop.f32.mrf.mxu0
      %923 = vmatprep.mubr.f32.mxu0 0.0
      %924 = vmatmul.mubr.f32.gmra.mxu0 %v704
      %v925 = vpop.f32.mrf.mxu0
      %v926 = vadd.f32 %v732, %v925
      %v927 = vpop.f32.mrf.mxu0
      %928 = vmatprep.mubr.f32.mxu0 0.0
      %929 = vmatmul.mubr.f32.gmra.mxu0 %v705
      %v930 = vpop.f32.mrf.mxu0
      %v931 = vadd.f32 %v732, %v930
      %v932 = vpop.f32.mrf.mxu0
      %933 = vmatprep.mubr.f32.mxu0 0.0
      %934 = vmatmul.mubr.f32.gmra.mxu0 %v706
      %v935 = vpop.f32.mrf.mxu0
      %v936 = vadd.f32 %v732, %v935
      %v937 = vpop.f32.mrf.mxu0
      %938 = vmatprep.mubr.f32.mxu0 0.0
      %939 = vmatmul.mubr.f32.gmra.mxu0 %v707
      %v940 = vpop.f32.mrf.mxu0
      %v941 = vadd.f32 %v732, %v940
      %v942 = vpop.f32.mrf.mxu0
      %943 = vmatprep.mubr.f32.mxu0 0.0
      %944 = vmatmul.mubr.f32.gmra.mxu0 %v708
      %v945 = vpop.f32.mrf.mxu0
      %v946 = vadd.f32 %v732, %v945
      %v947 = vpop.f32.mrf.mxu0
      %948 = vmatprep.mubr.f32.mxu0 0.0
      %949 = vmatmul.mubr.f32.gmra.mxu0 %v709
      %v950 = vpop.f32.mrf.mxu0
      %v951 = vadd.f32 %v732, %v950
      %v952 = vpop.f32.mrf.mxu0
      %953 = vmatprep.mubr.f32.mxu0 0.0
      %954 = vmatmul.mubr.f32.gmra.mxu0 %v710
      %v955 = vpop.f32.mrf.mxu0
      %v956 = vadd.f32 %v732, %v955
      %v957 = vpop.f32.mrf.mxu0
      %958 = vdwg.mxu0
      %v959 = vmul.f32 %v801, 0.18181819
      %v960 = vmul.f32 %v806, 0.18181819
      %v961 = vmul.f32 %v811, 0.18181819
      %v962 = vmul.f32 %v816, 0.18181819
      %v963 = vmul.f32 %v821, 0.18181819
      %v964 = vmul.f32 %v826, 0.18181819
      %v965 = vmul.f32 %v831, 0.18181819
      %v966 = vmul.f32 %v836, 0.18181819
      %v967 = vmul.f32 %v841, 0.18181819
      %v968 = vmul.f32 %v846, 0.18181819
      %v969 = vmul.f32 %v851, 0.18181819
      %v970 = vmul.f32 %v856, 0.18181819
      %v971 = vmul.f32 %v861, 0.18181819
      %v972 = vmul.f32 %v866, 0.18181819
      %v973 = vmul.f32 %v871, 0.18181819
      %v974 = vmul.f32 %v876, 0.18181819
      %v975 = vmul.f32 %v881, 0.18181819
      %v976 = vmul.f32 %v886, 0.18181819
      %v977 = vmul.f32 %v891, 0.18181819
      %v978 = vmul.f32 %v896, 0.18181819
      %v979 = vmul.f32 %v901, 0.18181819
      %v980 = vmul.f32 %v906, 0.18181819
      %v981 = vmul.f32 %v911, 0.18181819
      %v982 = vmul.f32 %v916, 0.18181819
      %v983 = vmul.f32 %v921, 0.18181819
      %v984 = vmul.f32 %v926, 0.18181819
      %v985 = vmul.f32 %v931, 0.18181819
      %v986 = vmul.f32 %v936, 0.18181819
      %v987 = vmul.f32 %v941, 0.18181819
      %v988 = vmul.f32 %v946, 0.18181819
      %v989 = vmul.f32 %v951, 0.18181819
      %v990 = vmul.f32 %v956, 0.18181819
      %v991 = vmax.f32 %v801, %v959
      %v992 = vmax.f32 %v806, %v960
      %v993 = vmax.f32 %v811, %v961
      %v994 = vmax.f32 %v816, %v962
      %v995 = vmax.f32 %v821, %v963
      %v996 = vmax.f32 %v826, %v964
      %v997 = vmax.f32 %v831, %v965
      %v998 = vmax.f32 %v836, %v966
      %v999 = vmax.f32 %v841, %v967
      %v1000 = vmax.f32 %v846, %v968
      %v1001 = vmax.f32 %v851, %v969
      %v1002 = vmax.f32 %v856, %v970
      %v1003 = vmax.f32 %v861, %v971
      %v1004 = vmax.f32 %v866, %v972
      %v1005 = vmax.f32 %v871, %v973
      %v1006 = vmax.f32 %v876, %v974
      %v1007 = vmax.f32 %v881, %v975
      %v1008 = vmax.f32 %v886, %v976
      %v1009 = vmax.f32 %v891, %v977
      %v1010 = vmax.f32 %v896, %v978
      %v1011 = vmax.f32 %v901, %v979
      %v1012 = vmax.f32 %v906, %v980
      %v1013 = vmax.f32 %v911, %v981
      %v1014 = vmax.f32 %v916, %v982
      %v1015 = vmax.f32 %v921, %v983
      %v1016 = vmax.f32 %v926, %v984
      %v1017 = vmax.f32 %v931, %v985
      %v1018 = vmax.f32 %v936, %v986
      %v1019 = vmax.f32 %v941, %v987
      %v1020 = vmax.f32 %v946, %v988
      %v1021 = vmax.f32 %v951, %v989
      %v1022 = vmax.f32 %v956, %v990
      %v1023 = vld [vmem:[%s5] sm:$0xff]
      %v1024 = vld [vmem:[%s5 + $0x8] sm:$0xff]
      %v1025 = vld [vmem:[%s5 + $0x10] sm:$0xff]
      %v1026 = vld [vmem:[%s5 + $0x18] sm:$0xff]
      %v1027 = vld [vmem:[%s5 + $0x20] sm:$0xff]
      %v1028 = vld [vmem:[%s5 + $0x28] sm:$0xff]
      %v1029 = vld [vmem:[%s5 + $0x30] sm:$0xff]
      %v1030 = vld [vmem:[%s5 + $0x38] sm:$0xff]
      %v1031 = vld [vmem:[%s5 + $0x40] sm:$0xff]
      %v1032 = vld [vmem:[%s5 + $0x48] sm:$0xff]
      %v1033 = vld [vmem:[%s5 + $0x50] sm:$0xff]
      %v1034 = vld [vmem:[%s5 + $0x58] sm:$0xff]
      %v1035 = vld [vmem:[%s5 + $0x60] sm:$0xff]
      %v1036 = vld [vmem:[%s5 + $0x68] sm:$0xff]
      %v1037 = vld [vmem:[%s5 + $0x70] sm:$0xff]
      %v1038 = vld [vmem:[%s5 + $0x78] sm:$0xff]
      %v1039 = vld [vmem:[%s6] sm:$0x1]
      %v1041 = vlaneseq
      %v1042 = vshrl.u32 %v1041, 7
      %v1043 = vsub.s32 0, %v1042
      %v1044 = vrot.slane %v1039, %v1043
      %1046 = vmatprep.subr.mxu0 0.0
      %1047 = vmatpush1.msra.mxu0 %v1038
      %1048 = vmatprep.subr.mxu0 0.0
      %1049 = vmatpush1.msra.mxu0 %v1037
      %1050 = vmatprep.subr.mxu0 0.0
      %1051 = vmatpush1.msra.mxu0 %v1036
      %1052 = vmatprep.subr.mxu0 0.0
      %1053 = vmatpush1.msra.mxu0 %v1035
      %1054 = vmatprep.subr.mxu0 0.0
      %1055 = vmatpush1.msra.mxu0 %v1034
      %1056 = vmatprep.subr.mxu0 0.0
      %1057 = vmatpush1.msra.mxu0 %v1033
      %1058 = vmatprep.subr.mxu0 0.0
      %1059 = vmatpush1.msra.mxu0 %v1032
      %1060 = vmatprep.subr.mxu0 0.0
      %1061 = vmatpush1.msra.mxu0 %v1031
      %1062 = vmatprep.subr.mxu0 0.0
      %1063 = vmatpush1.msra.mxu0 %v1030
      %1064 = vmatprep.subr.mxu0 0.0
      %1065 = vmatpush1.msra.mxu0 %v1029
      %1066 = vmatprep.subr.mxu0 0.0
      %1067 = vmatpush1.msra.mxu0 %v1028
      %1068 = vmatprep.subr.mxu0 0.0
      %1069 = vmatpush1.msra.mxu0 %v1027
      %1070 = vmatprep.subr.mxu0 0.0
      %1071 = vmatpush1.msra.mxu0 %v1026
      %1072 = vmatprep.subr.mxu0 0.0
      %1073 = vmatpush1.msra.mxu0 %v1025
      %1074 = vmatprep.subr.mxu0 0.0
      %1075 = vmatpush1.msra.mxu0 %v1024
      %1076 = vmatprep.subr.mxu0 0.0
      %1077 = vmatpush1.msra.mxu0 %v1023
      %1078 = vmatprep.subr.mxu0 0.0
      %1079 = vmatpush2.msra.mxu0 0.0
      %1080 = vmatprep.subr.mxu0 0.0
      %1081 = vmatpush2.msra.mxu0 0.0
      %1082 = vmatprep.subr.mxu0 0.0
      %1083 = vmatpush2.msra.mxu0 0.0
      %1084 = vmatprep.subr.mxu0 0.0
      %1085 = vmatpush2.msra.mxu0 0.0
      %1086 = vmatprep.subr.mxu0 0.0
      %1087 = vmatpush2.msra.mxu0 0.0
      %1088 = vmatprep.subr.mxu0 0.0
      %1089 = vmatpush2.msra.mxu0 0.0
      %1090 = vmatprep.subr.mxu0 0.0
      %1091 = vmatpush2.msra.mxu0 0.0
      %1092 = vmatprep.subr.mxu0 0.0
      %1093 = vmatpush2.msra.mxu0 0.0
      %1094 = vmatprep.subr.mxu0 0.0
      %1095 = vmatpush2.msra.mxu0 0.0
      %1096 = vmatprep.subr.mxu0 0.0
      %1097 = vmatpush2.msra.mxu0 0.0
      %1098 = vmatprep.subr.mxu0 0.0
      %1099 = vmatpush2.msra.mxu0 0.0
      %1100 = vmatprep.subr.mxu0 0.0
      %1101 = vmatpush2.msra.mxu0 0.0
      %1102 = vmatprep.subr.mxu0 0.0
      %1103 = vmatpush2.msra.mxu0 0.0
      %1104 = vmatprep.subr.mxu0 0.0
      %1105 = vmatpush2.msra.mxu0 0.0
      %1106 = vmatprep.subr.mxu0 0.0
      %1107 = vmatpush2.msra.mxu0 0.0
      %1108 = vmatprep.subr.mxu0 0.0
      %1109 = vmatpush2.msra.mxu0 0.0
      %1110 = vmatprep.mubr.f32.mxu0 0.0
      %1111 = vmatmul.mubr.f32.gmra.mxu0 %v991
      %v1112 = vpop.f32.mrf.mxu0
      %v1113 = vadd.f32 %v1044, %v1112
      %v1114 = vpop.f32.mrf.mxu0
      %1115 = vmatprep.mubr.f32.mxu0 0.0
      %1116 = vmatmul.mubr.f32.gmra.mxu0 %v992
      %v1117 = vpop.f32.mrf.mxu0
      %v1118 = vadd.f32 %v1044, %v1117
      %v1119 = vpop.f32.mrf.mxu0
      %1120 = vmatprep.mubr.f32.mxu0 0.0
      %1121 = vmatmul.mubr.f32.gmra.mxu0 %v993
      %v1122 = vpop.f32.mrf.mxu0
      %v1123 = vadd.f32 %v1044, %v1122
      %v1124 = vpop.f32.mrf.mxu0
      %1125 = vmatprep.mubr.f32.mxu0 0.0
      %1126 = vmatmul.mubr.f32.gmra.mxu0 %v994
      %v1127 = vpop.f32.mrf.mxu0
      %v1128 = vadd.f32 %v1044, %v1127
      %v1129 = vpop.f32.mrf.mxu0
      %1130 = vmatprep.mubr.f32.mxu0 0.0
      %1131 = vmatmul.mubr.f32.gmra.mxu0 %v995
      %v1132 = vpop.f32.mrf.mxu0
      %v1133 = vadd.f32 %v1044, %v1132
      %v1134 = vpop.f32.mrf.mxu0
      %1135 = vmatprep.mubr.f32.mxu0 0.0
      %1136 = vmatmul.mubr.f32.gmra.mxu0 %v996
      %v1137 = vpop.f32.mrf.mxu0
      %v1138 = vadd.f32 %v1044, %v1137
      %v1139 = vpop.f32.mrf.mxu0
      %1140 = vmatprep.mubr.f32.mxu0 0.0
      %1141 = vmatmul.mubr.f32.gmra.mxu0 %v997
      %v1142 = vpop.f32.mrf.mxu0
      %v1143 = vadd.f32 %v1044, %v1142
      %v1144 = vpop.f32.mrf.mxu0
      %1145 = vmatprep.mubr.f32.mxu0 0.0
      %1146 = vmatmul.mubr.f32.gmra.mxu0 %v998
      %v1147 = vpop.f32.mrf.mxu0
      %v1148 = vadd.f32 %v1044, %v1147
      %v1149 = vpop.f32.mrf.mxu0
      %1150 = vmatprep.mubr.f32.mxu0 0.0
      %1151 = vmatmul.mubr.f32.gmra.mxu0 %v999
      %v1152 = vpop.f32.mrf.mxu0
      %v1153 = vadd.f32 %v1044, %v1152
      %v1154 = vpop.f32.mrf.mxu0
      %1155 = vmatprep.mubr.f32.mxu0 0.0
      %1156 = vmatmul.mubr.f32.gmra.mxu0 %v1000
      %v1157 = vpop.f32.mrf.mxu0
      %v1158 = vadd.f32 %v1044, %v1157
      %v1159 = vpop.f32.mrf.mxu0
      %1160 = vmatprep.mubr.f32.mxu0 0.0
      %1161 = vmatmul.mubr.f32.gmra.mxu0 %v1001
      %v1162 = vpop.f32.mrf.mxu0
      %v1163 = vadd.f32 %v1044, %v1162
      %v1164 = vpop.f32.mrf.mxu0
      %1165 = vmatprep.mubr.f32.mxu0 0.0
      %1166 = vmatmul.mubr.f32.gmra.mxu0 %v1002
      %v1167 = vpop.f32.mrf.mxu0
      %v1168 = vadd.f32 %v1044, %v1167
      %v1169 = vpop.f32.mrf.mxu0
      %1170 = vmatprep.mubr.f32.mxu0 0.0
      %1171 = vmatmul.mubr.f32.gmra.mxu0 %v1003
      %v1172 = vpop.f32.mrf.mxu0
      %v1173 = vadd.f32 %v1044, %v1172
      %v1174 = vpop.f32.mrf.mxu0
      %1175 = vmatprep.mubr.f32.mxu0 0.0
      %1176 = vmatmul.mubr.f32.gmra.mxu0 %v1004
      %v1177 = vpop.f32.mrf.mxu0
      %v1178 = vadd.f32 %v1044, %v1177
      %v1179 = vpop.f32.mrf.mxu0
      %1180 = vmatprep.mubr.f32.mxu0 0.0
      %1181 = vmatmul.mubr.f32.gmra.mxu0 %v1005
      %v1182 = vpop.f32.mrf.mxu0
      %v1183 = vadd.f32 %v1044, %v1182
      %v1184 = vpop.f32.mrf.mxu0
      %1185 = vmatprep.mubr.f32.mxu0 0.0
      %1186 = vmatmul.mubr.f32.gmra.mxu0 %v1006
      %v1187 = vpop.f32.mrf.mxu0
      %v1188 = vadd.f32 %v1044, %v1187
      %v1189 = vpop.f32.mrf.mxu0
      %1190 = vmatprep.mubr.f32.mxu0 0.0
      %1191 = vmatmul.mubr.f32.gmra.mxu0 %v1007
      %v1192 = vpop.f32.mrf.mxu0
      %v1193 = vadd.f32 %v1044, %v1192
      %v1194 = vpop.f32.mrf.mxu0
      %1195 = vmatprep.mubr.f32.mxu0 0.0
      %1196 = vmatmul.mubr.f32.gmra.mxu0 %v1008
      %v1197 = vpop.f32.mrf.mxu0
      %v1198 = vadd.f32 %v1044, %v1197
      %v1199 = vpop.f32.mrf.mxu0
      %1200 = vmatprep.mubr.f32.mxu0 0.0
      %1201 = vmatmul.mubr.f32.gmra.mxu0 %v1009
      %v1202 = vpop.f32.mrf.mxu0
      %v1203 = vadd.f32 %v1044, %v1202
      %v1204 = vpop.f32.mrf.mxu0
      %1205 = vmatprep.mubr.f32.mxu0 0.0
      %1206 = vmatmul.mubr.f32.gmra.mxu0 %v1010
      %v1207 = vpop.f32.mrf.mxu0
      %v1208 = vadd.f32 %v1044, %v1207
      %v1209 = vpop.f32.mrf.mxu0
      %1210 = vmatprep.mubr.f32.mxu0 0.0
      %1211 = vmatmul.mubr.f32.gmra.mxu0 %v1011
      %v1212 = vpop.f32.mrf.mxu0
      %v1213 = vadd.f32 %v1044, %v1212
      %v1214 = vpop.f32.mrf.mxu0
      %1215 = vmatprep.mubr.f32.mxu0 0.0
      %1216 = vmatmul.mubr.f32.gmra.mxu0 %v1012
      %v1217 = vpop.f32.mrf.mxu0
      %v1218 = vadd.f32 %v1044, %v1217
      %v1219 = vpop.f32.mrf.mxu0
      %1220 = vmatprep.mubr.f32.mxu0 0.0
      %1221 = vmatmul.mubr.f32.gmra.mxu0 %v1013
      %v1222 = vpop.f32.mrf.mxu0
      %v1223 = vadd.f32 %v1044, %v1222
      %v1224 = vpop.f32.mrf.mxu0
      %1225 = vmatprep.mubr.f32.mxu0 0.0
      %1226 = vmatmul.mubr.f32.gmra.mxu0 %v1014
      %v1227 = vpop.f32.mrf.mxu0
      %v1228 = vadd.f32 %v1044, %v1227
      %v1229 = vpop.f32.mrf.mxu0
      %1230 = vmatprep.mubr.f32.mxu0 0.0
      %1231 = vmatmul.mubr.f32.gmra.mxu0 %v1015
      %v1232 = vpop.f32.mrf.mxu0
      %v1233 = vadd.f32 %v1044, %v1232
      %v1234 = vpop.f32.mrf.mxu0
      %1235 = vmatprep.mubr.f32.mxu0 0.0
      %1236 = vmatmul.mubr.f32.gmra.mxu0 %v1016
      %v1237 = vpop.f32.mrf.mxu0
      %v1238 = vadd.f32 %v1044, %v1237
      %v1239 = vpop.f32.mrf.mxu0
      %1240 = vmatprep.mubr.f32.mxu0 0.0
      %1241 = vmatmul.mubr.f32.gmra.mxu0 %v1017
      %v1242 = vpop.f32.mrf.mxu0
      %v1243 = vadd.f32 %v1044, %v1242
      %v1244 = vpop.f32.mrf.mxu0
      %1245 = vmatprep.mubr.f32.mxu0 0.0
      %1246 = vmatmul.mubr.f32.gmra.mxu0 %v1018
      %v1247 = vpop.f32.mrf.mxu0
      %v1248 = vadd.f32 %v1044, %v1247
      %v1249 = vpop.f32.mrf.mxu0
      %1250 = vmatprep.mubr.f32.mxu0 0.0
      %1251 = vmatmul.mubr.f32.gmra.mxu0 %v1019
      %v1252 = vpop.f32.mrf.mxu0
      %v1253 = vadd.f32 %v1044, %v1252
      %v1254 = vpop.f32.mrf.mxu0
      %1255 = vmatprep.mubr.f32.mxu0 0.0
      %1256 = vmatmul.mubr.f32.gmra.mxu0 %v1020
      %v1257 = vpop.f32.mrf.mxu0
      %v1258 = vadd.f32 %v1044, %v1257
      %v1259 = vpop.f32.mrf.mxu0
      %1260 = vmatprep.mubr.f32.mxu0 0.0
      %1261 = vmatmul.mubr.f32.gmra.mxu0 %v1021
      %v1262 = vpop.f32.mrf.mxu0
      %v1263 = vadd.f32 %v1044, %v1262
      %v1264 = vpop.f32.mrf.mxu0
      %1265 = vmatprep.mubr.f32.mxu0 0.0
      %1266 = vmatmul.mubr.f32.gmra.mxu0 %v1022
      %v1267 = vpop.f32.mrf.mxu0
      %v1268 = vadd.f32 %v1044, %v1267
      %v1269 = vpop.f32.mrf.mxu0
      %1270 = vdwg.mxu0
      %vm1271 = vcmask 130048
      %1272 = vst.msk [vmem:[%s280] sm:$0xff] %vm1271, %v1113
      %1273 = vst.msk [vmem:[%s280 + $0x8] sm:$0xff] %vm1271, %v1118
      %1274 = vst.msk [vmem:[%s280 + $0x10] sm:$0xff] %vm1271, %v1123
      %1275 = vst.msk [vmem:[%s280 + $0x18] sm:$0xff] %vm1271, %v1128
      %1276 = vst.msk [vmem:[%s280 + $0x20] sm:$0xff] %vm1271, %v1133
      %1277 = vst.msk [vmem:[%s280 + $0x28] sm:$0xff] %vm1271, %v1138
      %1278 = vst.msk [vmem:[%s280 + $0x30] sm:$0xff] %vm1271, %v1143
      %1279 = vst.msk [vmem:[%s280 + $0x38] sm:$0xff] %vm1271, %v1148
      %1280 = vst.msk [vmem:[%s280 + $0x40] sm:$0xff] %vm1271, %v1153
      %1281 = vst.msk [vmem:[%s280 + $0x48] sm:$0xff] %vm1271, %v1158
      %1282 = vst.msk [vmem:[%s280 + $0x50] sm:$0xff] %vm1271, %v1163
      %1283 = vst.msk [vmem:[%s280 + $0x58] sm:$0xff] %vm1271, %v1168
      %1284 = vst.msk [vmem:[%s280 + $0x60] sm:$0xff] %vm1271, %v1173
      %1285 = vst.msk [vmem:[%s280 + $0x68] sm:$0xff] %vm1271, %v1178
      %1286 = vst.msk [vmem:[%s280 + $0x70] sm:$0xff] %vm1271, %v1183
      %1287 = vst.msk [vmem:[%s280 + $0x78] sm:$0xff] %vm1271, %v1188
      %1288 = vst.msk [vmem:[%s280 + $0x80] sm:$0xff] %vm1271, %v1193
      %1289 = vst.msk [vmem:[%s280 + $0x88] sm:$0xff] %vm1271, %v1198
      %1290 = vst.msk [vmem:[%s280 + $0x90] sm:$0xff] %vm1271, %v1203
      %1291 = vst.msk [vmem:[%s280 + $0x98] sm:$0xff] %vm1271, %v1208
      %1292 = vst.msk [vmem:[%s280 + $0xa0] sm:$0xff] %vm1271, %v1213
      %1293 = vst.msk [vmem:[%s280 + $0xa8] sm:$0xff] %vm1271, %v1218
      %1294 = vst.msk [vmem:[%s280 + $0xb0] sm:$0xff] %vm1271, %v1223
      %1295 = vst.msk [vmem:[%s280 + $0xb8] sm:$0xff] %vm1271, %v1228
      %1296 = vst.msk [vmem:[%s280 + $0xc0] sm:$0xff] %vm1271, %v1233
      %1297 = vst.msk [vmem:[%s280 + $0xc8] sm:$0xff] %vm1271, %v1238
      %1298 = vst.msk [vmem:[%s280 + $0xd0] sm:$0xff] %vm1271, %v1243
      %1299 = vst.msk [vmem:[%s280 + $0xd8] sm:$0xff] %vm1271, %v1248
      %1300 = vst.msk [vmem:[%s280 + $0xe0] sm:$0xff] %vm1271, %v1253
      %1301 = vst.msk [vmem:[%s280 + $0xe8] sm:$0xff] %vm1271, %v1258
      %1302 = vst.msk [vmem:[%s280 + $0xf0] sm:$0xff] %vm1271, %v1263
      %1303 = vst.msk [vmem:[%s280 + $0xf8] sm:$0xff] %vm1271, %v1268
      %s1304 = smul.u32 32, %s18
      %p1305 = scmp.lt.s32.totalorder %s1304, 63
      %s1306 = scalar_select %p1305, %s1304, 63
      %s1307 = smul.addr %s1306, 8
      %s1308 = scalar_lea.vmem %s7, %s1307
      // Predicated region
      $region49: #{tpu_custom_call.1} parent=47 // pred_check
        %p1309 = pneg %p188
      $region50: #{tpu_custom_call.1} parent=47 // pred_check_branch
        %1311 = sbr.rel (%p1309) target = $region52
      $region51: #{tpu_custom_call.1} parent=47 // pred_region
        %s1312 = smul.u32 32, %s18
      $region52: #{tpu_custom_call.1} parent=47 // pred_fallthru
        _
    $region48: #{tpu_custom_call.1} parent=5 // pred_fallthru
      _
    %p1313 = scmp.le.s32.totalorder 2, %s13
    // Predicated region
    $region53: #{tpu_custom_call.1} parent=5 // pred_check
      %p1314 = pneg %p1313
    $region54: #{tpu_custom_call.1} parent=5 // pred_check_branch
      %1316 = sbr.rel (%p1314) target = $region56
    $region55: #{tpu_custom_call.1} parent=5 // pred_region
      %s1317 = ssub.s32 %s13, 2
      // Predicated region
      $region57: #{tpu_custom_call.1} parent=55 // pred_check
        %p1318 = pneg %p194
      $region58: #{tpu_custom_call.1} parent=55 // pred_check_branch
        %1320 = sbr.rel (%p1318) target = $region60
      $region59: #{tpu_custom_call.1} parent=55 // pred_region
        %s1321 = smul.u32 32, %s19
        %p1322 = scmp.lt.s32.totalorder %s1321, 63
        %s1323 = scalar_select %p1322, %s1321, 63
        %s1324 = smul.addr %s1323, 8
        %s1325 = scalar_lea.vmem %s7, %s1324
      $region60: #{tpu_custom_call.1} parent=55 // pred_fallthru
        _
    $region56: #{tpu_custom_call.1} parent=5 // pred_fallthru
      _
  $region6: #{tpu_custom_call.1} parent=0 // loop_footer
    %s17 = sadd.s32 1, %s13
  $region7: #{tpu_custom_call.1} parent=0 // loop_footer_branch
    %12 = sbr.rel target = $region3
  $region8: #{tpu_custom_call.1} parent=0 // loop_exit
    _

// kernel: tpu_custom_call.1
$region0: #{tpu_custom_call.1}
  #allocation0 [shape = 'u32[]', space=smem, size = 0x4, offset = 0x4, fixed_abs, tag = 'smem constant byte address 0x4 - core index']
  #allocation1 [shape = 'u32[144,128]{1,0:T(1,128)}', space=vmem, size = 0x12000, scoped, tag = 'internal scratch']
  %s0 = inlined_call_operand.vmem [shape: f32[512,32], index: 0, kind: input, shape index: {}]
  %s1 = inlined_call_operand.vmem [shape: f32[32,128], index: 1, kind: input, shape index: {}]
  %s2 = inlined_call_operand.vmem [shape: f32[1,128], index: 2, kind: input, shape index: {}]
  %s3 = inlined_call_operand.vmem [shape: f32[128,128], index: 3, kind: input, shape index: {}]
  %s4 = inlined_call_operand.vmem [shape: f32[1,128], index: 4, kind: input, shape index: {}]
  %s5 = inlined_call_operand.vmem [shape: f32[128,16], index: 5, kind: input, shape index: {}]
  %s6 = inlined_call_operand.vmem [shape: f32[1,16], index: 6, kind: input, shape index: {}]
  %s7 = inlined_call_operand.vmem [shape: f32[512,16], index: 7, kind: output, shape index: {}]
  %s8 = sld [smem:[#allocation0]]
  $region61: #{tpu_custom_call.1} parent=0
    _
  %s10 = ssub.s32 1, %s8
  %s11 = scalar_select 0, %s10, %s8
  loop: start=0, step=1, limit=4
  $region2: #{tpu_custom_call.1} parent=0 // loop_pre_header
    _
  $region3: #{tpu_custom_call.1} parent=0 // loop_header
    %s13 = sphi 0, %s17
    %p14 = scmp.ge.s32.totalorder %s13, 4
    %s23 = sphi 0, %s25
    %s26 = sphi 0, %s23
    %s27 = sphi 0, %s26
    %s43 = sphi 0, %s27
    %s47 = sphi 0, %s47
    %s49 = sphi 0, %s47
    %s50 = sphi 0, %s49
    %s64 = sphi 0, %s50
    %s68 = sphi 0, %s68
    %s70 = sphi 0, %s68
    %s71 = sphi 0, %s70
    %s85 = sphi 0, %s71
    %s89 = sphi 0, %s89
    %s91 = sphi 0, %s89
    %s92 = sphi 0, %s91
    %s106 = sphi 0, %s92
    %s110 = sphi 0, %s110
    %s112 = sphi 0, %s110
    %s113 = sphi 0, %s112
    %s127 = sphi 0, %s113
    %s131 = sphi 0, %s131
    %s133 = sphi 0, %s131
    %s134 = sphi 0, %s133
    %s148 = sphi 0, %s134
    %s152 = sphi 0, %s152
    %s154 = sphi 0, %s152
    %s155 = sphi 0, %s154
    %s169 = sphi 0, %s155
    %s175 = sphi 0, %s177
    %s178 = sphi 0, %s175
    %s179 = sphi 0, %s178
    %s195 = sphi 0, %s179
  $region4: #{tpu_custom_call.1} parent=0 // loop_header_branch
    %16 = sbr.rel (%p14) target = $region8
  $region5: #{tpu_custom_call.1} parent=0 // loop_body
    %s18 = ssub.s32 %s13, 1
    %s19 = ssub.s32 %s13, 2
    %s20 = sadd.s32 %s13, 1
    %s21 = ssub.s32 %s13, %s20
    %p22 = scmp.eq.s32.totalorder %s21, 0
    %s24 = sadd.s32 %s23, 1
    %s25 = scalar_select %p22, %s23, %s24
    %p28 = pneg %p22
    %p29 = scmp.eq.s32.totalorder %s13, 1
    %p30 = por %p28, %p29
    %p31 = scmp.ne.s32.totalorder %s23, %s26
    %p32 = scmp.eq.s32.totalorder %s13, 0
    %p33 = por %p31, %p32
    %p34 = scmp.ne.s32.totalorder %s23, %s26
    %p35 = scmp.eq.s32.totalorder %s18, 1
    %p36 = por %p34, %p35
    %p37 = scmp.ne.s32.totalorder %s26, %s27
    %p38 = scmp.eq.s32.totalorder %s18, 0
    %p39 = por %p37, %p38
    %p40 = scmp.ne.s32.totalorder %s26, %s27
    %p41 = scmp.eq.s32.totalorder %s19, 1
    %p42 = por %p40, %p41
    %p44 = scmp.ne.s32.totalorder %s27, %s43
    %p45 = scmp.eq.s32.totalorder %s19, 0
    %p46 = por %p44, %p45
    %s48 = sadd.s32 %s47, 1
    %p51 = scmp.eq.s32.totalorder %s13, 1
    %p52 = scmp.ne.s32.totalorder %s47, %s49
    %p53 = scmp.eq.s32.totalorder %s13, 0
    %p54 = por %p52, %p53
    %p55 = scmp.ne.s32.totalorder %s47, %s49
    %p56 = scmp.eq.s32.totalorder %s18, 1
    %p57 = por %p55, %p56
    %p58 = scmp.ne.s32.totalorder %s49, %s50
    %p59 = scmp.eq.s32.totalorder %s18, 0
    %p60 = por %p58, %p59
    %p61 = scmp.ne.s32.totalorder %s49, %s50
    %p62 = scmp.eq.s32.totalorder %s19, 1
    %p63 = por %p61, %p62
    %p65 = scmp.ne.s32.totalorder %s50, %s64
    %p66 = scmp.eq.s32.totalorder %s19, 0
    %p67 = por %p65, %p66
    %s69 = sadd.s32 %s68, 1
    %p72 = scmp.eq.s32.totalorder %s13, 1
    %p73 = scmp.ne.s32.totalorder %s68, %s70
    %p74 = scmp.eq.s32.totalorder %s13, 0
    %p75 = por %p73, %p74
    %p76 = scmp.ne.s32.totalorder %s68, %s70
    %p77 = scmp.eq.s32.totalorder %s18, 1
    %p78 = por %p76, %p77
    %p79 = scmp.ne.s32.totalorder %s70, %s71
    %p80 = scmp.eq.s32.totalorder %s18, 0
    %p81 = por %p79, %p80
    %p82 = scmp.ne.s32.totalorder %s70, %s71
    %p83 = scmp.eq.s32.totalorder %s19, 1
    %p84 = por %p82, %p83
    %p86 = scmp.ne.s32.totalorder %s71, %s85
    %p87 = scmp.eq.s32.totalorder %s19, 0
    %p88 = por %p86, %p87
    %s90 = sadd.s32 %s89, 1
    %p93 = scmp.eq.s32.totalorder %s13, 1
    %p94 = scmp.ne.s32.totalorder %s89, %s91
    %p95 = scmp.eq.s32.totalorder %s13, 0
    %p96 = por %p94, %p95
    %p97 = scmp.ne.s32.totalorder %s89, %s91
    %p98 = scmp.eq.s32.totalorder %s18, 1
    %p99 = por %p97, %p98
    %p100 = scmp.ne.s32.totalorder %s91, %s92
    %p101 = scmp.eq.s32.totalorder %s18, 0
    %p102 = por %p100, %p101
    %p103 = scmp.ne.s32.totalorder %s91, %s92
    %p104 = scmp.eq.s32.totalorder %s19, 1
    %p105 = por %p103, %p104
    %p107 = scmp.ne.s32.totalorder %s92, %s106
    %p108 = scmp.eq.s32.totalorder %s19, 0
    %p109 = por %p107, %p108
    %s111 = sadd.s32 %s110, 1
    %p114 = scmp.eq.s32.totalorder %s13, 1
    %p115 = scmp.ne.s32.totalorder %s110, %s112
    %p116 = scmp.eq.s32.totalorder %s13, 0
    %p117 = por %p115, %p116
    %p118 = scmp.ne.s32.totalorder %s110, %s112
    %p119 = scmp.eq.s32.totalorder %s18, 1
    %p120 = por %p118, %p119
    %p121 = scmp.ne.s32.totalorder %s112, %s113
    %p122 = scmp.eq.s32.totalorder %s18, 0
    %p123 = por %p121, %p122
    %p124 = scmp.ne.s32.totalorder %s112, %s113
    %p125 = scmp.eq.s32.totalorder %s19, 1
    %p126 = por %p124, %p125
    %p128 = scmp.ne.s32.totalorder %s113, %s127
    %p129 = scmp.eq.s32.totalorder %s19, 0
    %p130 = por %p128, %p129
    %s132 = sadd.s32 %s131, 1
    %p135 = scmp.eq.s32.totalorder %s13, 1
    %p136 = scmp.ne.s32.totalorder %s131, %s133
    %p137 = scmp.eq.s32.totalorder %s13, 0
    %p138 = por %p136, %p137
    %p139 = scmp.ne.s32.totalorder %s131, %s133
    %p140 = scmp.eq.s32.totalorder %s18, 1
    %p141 = por %p139, %p140
    %p142 = scmp.ne.s32.totalorder %s133, %s134
    %p143 = scmp.eq.s32.totalorder %s18, 0
    %p144 = por %p142, %p143
    %p145 = scmp.ne.s32.totalorder %s133, %s134
    %p146 = scmp.eq.s32.totalorder %s19, 1
    %p147 = por %p145, %p146
    %p149 = scmp.ne.s32.totalorder %s134, %s148
    %p150 = scmp.eq.s32.totalorder %s19, 0
    %p151 = por %p149, %p150
    %s153 = sadd.s32 %s152, 1
    %p156 = scmp.eq.s32.totalorder %s13, 1
    %p157 = scmp.ne.s32.totalorder %s152, %s154
    %p158 = scmp.eq.s32.totalorder %s13, 0
    %p159 = por %p157, %p158
    %p160 = scmp.ne.s32.totalorder %s152, %s154
    %p161 = scmp.eq.s32.totalorder %s18, 1
    %p162 = por %p160, %p161
    %p163 = scmp.ne.s32.totalorder %s154, %s155
    %p164 = scmp.eq.s32.totalorder %s18, 0
    %p165 = por %p163, %p164
    %p166 = scmp.ne.s32.totalorder %s154, %s155
    %p167 = scmp.eq.s32.totalorder %s19, 1
    %p168 = por %p166, %p167
    %p170 = scmp.ne.s32.totalorder %s155, %s169
    %p171 = scmp.eq.s32.totalorder %s19, 0
    %p172 = por %p170, %p171
    %s173 = ssub.s32 %s13, %s20
    %p174 = scmp.eq.s32.totalorder %s173, 0
    %s176 = sadd.s32 %s175, 1
    %s177 = scalar_select %p174, %s175, %s176
    %p180 = pneg %p174
    %p181 = scmp.eq.s32.totalorder %s13, 1
    %p182 = por %p180, %p181
    %p183 = scmp.ne.s32.totalorder %s175, %s178
    %p184 = scmp.eq.s32.totalorder %s13, 0
    %p185 = por %p183, %p184
    %p186 = scmp.ne.s32.totalorder %s175, %s178
    %p187 = scmp.eq.s32.totalorder %s18, 1
    %p188 = por %p186, %p187
    %p189 = scmp.ne.s32.totalorder %s178, %s179
    %p190 = scmp.eq.s32.totalorder %s18, 0
    %p191 = por %p189, %p190
    %p192 = scmp.ne.s32.totalorder %s178, %s179
    %p193 = scmp.eq.s32.totalorder %s19, 1
    %p194 = por %p192, %p193
    %p196 = scmp.ne.s32.totalorder %s179, %s195
    %p197 = scmp.eq.s32.totalorder %s19, 0
    %p198 = por %p196, %p197
    %p199 = scmp.le.s32.totalorder 1, %s13
    %p200 = scmp.lt.s32.totalorder %s13, 3
    %p201 = pnand %p199, %p200
    %p202 = pneg %p201
    // Predicated region
    $region9: #{tpu_custom_call.1} parent=5 // pred_check
      _
    $region10: #{tpu_custom_call.1} parent=5 // pred_check_branch
      %204 = sbr.rel (%p201) target = $region12
    $region11: #{tpu_custom_call.1} parent=5 // pred_region
      %s205 = ssub.s32 %s13, 1
      // Predicated region
      $region13: #{tpu_custom_call.1} parent=11 // pred_check
        %p206 = pneg %p60
      $region14: #{tpu_custom_call.1} parent=11 // pred_check_branch
        %208 = sbr.rel (%p206) target = $region16
      $region15: #{tpu_custom_call.1} parent=11 // pred_region
        _
      $region16: #{tpu_custom_call.1} parent=11 // pred_fallthru
        _
      // Predicated region
      $region17: #{tpu_custom_call.1} parent=11 // pred_check
        %p209 = pneg %p81
      $region18: #{tpu_custom_call.1} parent=11 // pred_check_branch
        %211 = sbr.rel (%p209) target = $region20
      $region19: #{tpu_custom_call.1} parent=11 // pred_region
        _
      $region20: #{tpu_custom_call.1} parent=11 // pred_fallthru
        _
      // Predicated region
      $region21: #{tpu_custom_call.1} parent=11 // pred_check
        %p212 = pneg %p102
      $region22: #{tpu_custom_call.1} parent=11 // pred_check_branch
        %214 = sbr.rel (%p212) target = $region24
      $region23: #{tpu_custom_call.1} parent=11 // pred_region
        _
      $region24: #{tpu_custom_call.1} parent=11 // pred_fallthru
        _
      // Predicated region
      $region25: #{tpu_custom_call.1} parent=11 // pred_check
        %p215 = pneg %p123
      $region26: #{tpu_custom_call.1} parent=11 // pred_check_branch
        %217 = sbr.rel (%p215) target = $region28
      $region27: #{tpu_custom_call.1} parent=11 // pred_region
        _
      $region28: #{tpu_custom_call.1} parent=11 // pred_fallthru
        _
      // Predicated region
      $region29: #{tpu_custom_call.1} parent=11 // pred_check
        %p218 = pneg %p144
      $region30: #{tpu_custom_call.1} parent=11 // pred_check_branch
        %220 = sbr.rel (%p218) target = $region32
      $region31: #{tpu_custom_call.1} parent=11 // pred_region
        _
      $region32: #{tpu_custom_call.1} parent=11 // pred_fallthru
        _
      // Predicated region
      $region33: #{tpu_custom_call.1} parent=11 // pred_check
        %p221 = pneg %p165
      $region34: #{tpu_custom_call.1} parent=11 // pred_check_branch
        %223 = sbr.rel (%p221) target = $region36
      $region35: #{tpu_custom_call.1} parent=11 // pred_region
        _
      $region36: #{tpu_custom_call.1} parent=11 // pred_fallthru
        _
    $region12: #{tpu_custom_call.1} parent=5 // pred_fallthru
      _
    %p224 = scmp.lt.s32.totalorder %s13, 2
    // Predicated region
    $region37: #{tpu_custom_call.1} parent=5 // pred_check
      %p225 = pneg %p224
    $region38: #{tpu_custom_call.1} parent=5 // pred_check_branch
      %227 = sbr.rel (%p225) target = $region40
    $region39: #{tpu_custom_call.1} parent=5 // pred_region
      // Predicated region
      $region41: #{tpu_custom_call.1} parent=39 // pred_check
        %p228 = pneg %p33
      $region42: #{tpu_custom_call.1} parent=39 // pred_check_branch
        %230 = sbr.rel (%p228) target = $region44
      $region43: #{tpu_custom_call.1} parent=39 // pred_region
        %s231 = smul.u32 32, %s13
        %p232 = scmp.lt.s32.totalorder %s231, 63
        %s233 = scalar_select %p232, %s231, 63
        %s234 = smul.addr %s233, 8
        %s235 = scalar_lea.vmem %s0, %s234
        %s236 = smul.u32 32, %s13
      $region44: #{tpu_custom_call.1} parent=39 // pred_fallthru
        _
    $region40: #{tpu_custom_call.1} parent=5 // pred_fallthru
      _
    %p237 = scmp.le.s32.totalorder 1, %s13
    %p238 = scmp.lt.s32.totalorder %s13, 3
    %p239 = pnand %p237, %p238
    %p240 = pneg %p239
    // Predicated region
    $region45: #{tpu_custom_call.1} parent=5 // pred_check
      _
    $region46: #{tpu_custom_call.1} parent=5 // pred_check_branch
      %242 = sbr.rel (%p239) target = $region48
    $region47: #{tpu_custom_call.1} parent=5 // pred_region
      %s243 = ssub.s32 %s13, 1
      %s244 = smul.u32 32, %s18
      %p245 = scmp.lt.s32.totalorder %s244, 63
      %s246 = scalar_select %p245, %s244, 63
      %s247 = smul.addr %s246, 8
      %s248 = scalar_lea.vmem %s0, %s247
      %p249 = pneg %p39
      %p250 = pneg %p36
      %p251 = pneg %p60
      %p252 = pneg %p57
      %p253 = pneg %p81
      %p254 = pneg %p78
      %p255 = pneg %p102
      %p256 = pneg %p99
      %p257 = pneg %p123
      %p258 = pneg %p120
      %p259 = pneg %p144
      %p260 = pneg %p141
      %p261 = pneg %p165
      %p262 = pneg %p162
      %p263 = pneg %p191
      %p264 = pneg %p188
      %s265 = smul.u32 32, %s18
      %p266 = scmp.lt.s32.totalorder %s265, 63
      %s267 = scalar_select %p266, %s265, 63
      %s268 = smul.addr %s267, 8
      %s269 = scalar_lea.vmem %s7, %s268
      %s270 = smul.u32 32, %s18
      %p271 = scmp.lt.s32.totalorder %s270, 63
      %s272 = scalar_select %p271, %s270, 63
      %s273 = smul.addr %s272, 8
      %s274 = scalar_lea.vmem %s0, %s273
      %s275 = smul.u32 32, %s18
      %s276 = smul.u32 32, %s18
      %p277 = scmp.lt.s32.totalorder %s276, 63
      %s278 = scalar_select %p277, %s276, 63
      %s279 = smul.addr %s278, 8
      %s280 = scalar_lea.vmem %s7, %s279
      %s281 = smul.u32 32, %s18
      %v282 = vld [vmem:[%s274] sm:$0xff]
      %v283 = vld [vmem:[%s274 + $0x8] sm:$0xff]
      %v284 = vld [vmem:[%s274 + $0x10] sm:$0xff]
      %v285 = vld [vmem:[%s274 + $0x18] sm:$0xff]
      %v286 = vld [vmem:[%s274 + $0x20] sm:$0xff]
      %v287 = vld [vmem:[%s274 + $0x28] sm:$0xff]
      %v288 = vld [vmem:[%s274 + $0x30] sm:$0xff]
      %v289 = vld [vmem:[%s274 + $0x38] sm:$0xff]
      %v290 = vld [vmem:[%s274 + $0x40] sm:$0xff]
      %v291 = vld [vmem:[%s274 + $0x48] sm:$0xff]
      %v292 = vld [vmem:[%s274 + $0x50] sm:$0xff]
      %v293 = vld [vmem:[%s274 + $0x58] sm:$0xff]
      %v294 = vld [vmem:[%s274 + $0x60] sm:$0xff]
      %v295 = vld [vmem:[%s274 + $0x68] sm:$0xff]
      %v296 = vld [vmem:[%s274 + $0x70] sm:$0xff]
      %v297 = vld [vmem:[%s274 + $0x78] sm:$0xff]
      %v298 = vld [vmem:[%s274 + $0x80] sm:$0xff]
      %v299 = vld [vmem:[%s274 + $0x88] sm:$0xff]
      %v300 = vld [vmem:[%s274 + $0x90] sm:$0xff]
      %v301 = vld [vmem:[%s274 + $0x98] sm:$0xff]
      %v302 = vld [vmem:[%s274 + $0xa0] sm:$0xff]
      %v303 = vld [vmem:[%s274 + $0xa8] sm:$0xff]
      %v304 = vld [vmem:[%s274 + $0xb0] sm:$0xff]
      %v305 = vld [vmem:[%s274 + $0xb8] sm:$0xff]
      %v306 = vld [vmem:[%s274 + $0xc0] sm:$0xff]
      %v307 = vld [vmem:[%s274 + $0xc8] sm:$0xff]
      %v308 = vld [vmem:[%s274 + $0xd0] sm:$0xff]
      %v309 = vld [vmem:[%s274 + $0xd8] sm:$0xff]
      %v310 = vld [vmem:[%s274 + $0xe0] sm:$0xff]
      %v311 = vld [vmem:[%s274 + $0xe8] sm:$0xff]
      %v312 = vld [vmem:[%s274 + $0xf0] sm:$0xff]
      %v313 = vld [vmem:[%s274 + $0xf8] sm:$0xff]
      %v314 = vld [vmem:[%s1] sm:$0xff]
      %v315 = vld [vmem:[%s1 + $0x8] sm:$0xff]
      %v316 = vld [vmem:[%s1 + $0x10] sm:$0xff]
      %v317 = vld [vmem:[%s1 + $0x18] sm:$0xff]
      %v318 = vld [vmem:[%s2] sm:$0x1]
      %v320 = vlaneseq
      %v321 = vshrl.u32 %v320, 7
      %v322 = vsub.s32 0, %v321
      %v323 = vrot.slane %v318, %v322
      %vm325 = vcmask 261120
      %v327 = vsel %vm325, %v282, 0
      %v330 = vsel %vm325, %v283, 0
      %v333 = vsel %vm325, %v284, 0
      %v336 = vsel %vm325, %v285, 0
      %v339 = vsel %vm325, %v286, 0
      %v342 = vsel %vm325, %v287, 0
      %v345 = vsel %vm325, %v288, 0
      %v348 = vsel %vm325, %v289, 0
      %v351 = vsel %vm325, %v290, 0
      %v354 = vsel %vm325, %v291, 0
      %v357 = vsel %vm325, %v292, 0
      %v360 = vsel %vm325, %v293, 0
      %v363 = vsel %vm325, %v294, 0
      %v366 = vsel %vm325, %v295, 0
      %v369 = vsel %vm325, %v296, 0
      %v372 = vsel %vm325, %v297, 0
      %v375 = vsel %vm325, %v298, 0
      %v378 = vsel %vm325, %v299, 0
      %v381 = vsel %vm325, %v300, 0
      %v384 = vsel %vm325, %v301, 0
      %v387 = vsel %vm325, %v302, 0
      %v390 = vsel %vm325, %v303, 0
      %v393 = vsel %vm325, %v304, 0
      %v396 = vsel %vm325, %v305, 0
      %v399 = vsel %vm325, %v306, 0
      %v402 = vsel %vm325, %v307, 0
      %v405 = vsel %vm325, %v308, 0
      %v408 = vsel %vm325, %v309, 0
      %v411 = vsel %vm325, %v310, 0
      %v414 = vsel %vm325, %v311, 0
      %v417 = vsel %vm325, %v312, 0
      %v420 = vsel %vm325, %v313, 0
      %422 = vmatprep.subr.mxu0 0.0
      %423 = vmatpush1.msra.mxu0 0.0
      %424 = vmatprep.subr.mxu0 0.0
      %425 = vmatpush1.msra.mxu0 0.0
      %426 = vmatprep.subr.mxu0 0.0
      %427 = vmatpush1.msra.mxu0 0.0
      %428 = vmatprep.subr.mxu0 0.0
      %429 = vmatpush1.msra.mxu0 0.0
      %430 = vmatprep.subr.mxu0 0.0
      %431 = vmatpush1.msra.mxu0 0.0
      %432 = vmatprep.subr.mxu0 0.0
      %433 = vmatpush1.msra.mxu0 0.0
      %434 = vmatprep.subr.mxu0 0.0
      %435 = vmatpush1.msra.mxu0 0.0
      %436 = vmatprep.subr.mxu0 0.0
      %437 = vmatpush1.msra.mxu0 0.0
      %438 = vmatprep.subr.mxu0 0.0
      %439 = vmatpush1.msra.mxu0 0.0
      %440 = vmatprep.subr.mxu0 0.0
      %441 = vmatpush1.msra.mxu0 0.0
      %442 = vmatprep.subr.mxu0 0.0
      %443 = vmatpush1.msra.mxu0 0.0
      %444 = vmatprep.subr.mxu0 0.0
      %445 = vmatpush1.msra.mxu0 0.0
      %446 = vmatprep.subr.mxu0 0.0
      %447 = vmatpush1.msra.mxu0 %v317
      %448 = vmatprep.subr.mxu0 0.0
      %449 = vmatpush1.msra.mxu0 %v316
      %450 = vmatprep.subr.mxu0 0.0
      %451 = vmatpush1.msra.mxu0 %v315
      %452 = vmatprep.subr.mxu0 0.0
      %453 = vmatpush1.msra.mxu0 %v314
      %454 = vmatprep.subr.mxu0 0.0
      %455 = vmatpush2.msra.mxu0 0.0
      %456 = vmatprep.subr.mxu0 0.0
      %457 = vmatpush2.msra.mxu0 0.0
      %458 = vmatprep.subr.mxu0 0.0
      %459 = vmatpush2.msra.mxu0 0.0
      %460 = vmatprep.subr.mxu0 0.0
      %461 = vmatpush2.msra.mxu0 0.0
      %462 = vmatprep.subr.mxu0 0.0
      %463 = vmatpush2.msra.mxu0 0.0
      %464 = vmatprep.subr.mxu0 0.0
      %465 = vmatpush2.msra.mxu0 0.0
      %466 = vmatprep.subr.mxu0 0.0
      %467 = vmatpush2.msra.mxu0 0.0
      %468 = vmatprep.subr.mxu0 0.0
      %469 = vmatpush2.msra.mxu0 0.0
      %470 = vmatprep.subr.mxu0 0.0
      %471 = vmatpush2.msra.mxu0 0.0
      %472 = vmatprep.subr.mxu0 0.0
      %473 = vmatpush2.msra.mxu0 0.0
      %474 = vmatprep.subr.mxu0 0.0
      %475 = vmatpush2.msra.mxu0 0.0
      %476 = vmatprep.subr.mxu0 0.0
      %477 = vmatpush2.msra.mxu0 0.0
      %478 = vmatprep.subr.mxu0 0.0
      %479 = vmatpush2.msra.mxu0 0.0
      %480 = vmatprep.subr.mxu0 0.0
      %481 = vmatpush2.msra.mxu0 0.0
      %482 = vmatprep.subr.mxu0 0.0
      %483 = vmatpush2.msra.mxu0 0.0
      %484 = vmatprep.subr.mxu0 0.0
      %485 = vmatpush2.msra.mxu0 0.0
      %486 = vmatprep.mubr.f32.mxu0 0.0
      %487 = vmatmul.mubr.f32.gmra.mxu0 %v327
      %v488 = vpop.f32.mrf.mxu0
      %v489 = vadd.f32 %v323, %v488
      %v490 = vpop.f32.mrf.mxu0
      %491 = vmatprep.mubr.f32.mxu0 0.0
      %492 = vmatmul.mubr.f32.gmra.mxu0 %v330
      %v493 = vpop.f32.mrf.mxu0
      %v494 = vadd.f32 %v323, %v493
      %v495 = vpop.f32.mrf.mxu0
      %496 = vmatprep.mubr.f32.mxu0 0.0
      %497 = vmatmul.mubr.f32.gmra.mxu0 %v333
      %v498 = vpop.f32.mrf.mxu0
      %v499 = vadd.f32 %v323, %v498
      %v500 = vpop.f32.mrf.mxu0
      %501 = vmatprep.mubr.f32.mxu0 0.0
      %502 = vmatmul.mubr.f32.gmra.mxu0 %v336
      %v503 = vpop.f32.mrf.mxu0
      %v504 = vadd.f32 %v323, %v503
      %v505 = vpop.f32.mrf.mxu0
      %506 = vmatprep.mubr.f32.mxu0 0.0
      %507 = vmatmul.mubr.f32.gmra.mxu0 %v339
      %v508 = vpop.f32.mrf.mxu0
      %v509 = vadd.f32 %v323, %v508
      %v510 = vpop.f32.mrf.mxu0
      %511 = vmatprep.mubr.f32.mxu0 0.0
      %512 = vmatmul.mubr.f32.gmra.mxu0 %v342
      %v513 = vpop.f32.mrf.mxu0
      %v514 = vadd.f32 %v323, %v513
      %v515 = vpop.f32.mrf.mxu0
      %516 = vmatprep.mubr.f32.mxu0 0.0
      %517 = vmatmul.mubr.f32.gmra.mxu0 %v345
      %v518 = vpop.f32.mrf.mxu0
      %v519 = vadd.f32 %v323, %v518
      %v520 = vpop.f32.mrf.mxu0
      %521 = vmatprep.mubr.f32.mxu0 0.0
      %522 = vmatmul.mubr.f32.gmra.mxu0 %v348
      %v523 = vpop.f32.mrf.mxu0
      %v524 = vadd.f32 %v323, %v523
      %v525 = vpop.f32.mrf.mxu0
      %526 = vmatprep.mubr.f32.mxu0 0.0
      %527 = vmatmul.mubr.f32.gmra.mxu0 %v351
      %v528 = vpop.f32.mrf.mxu0
      %v529 = vadd.f32 %v323, %v528
      %v530 = vpop.f32.mrf.mxu0
      %531 = vmatprep.mubr.f32.mxu0 0.0
      %532 = vmatmul.mubr.f32.gmra.mxu0 %v354
      %v533 = vpop.f32.mrf.mxu0
      %v534 = vadd.f32 %v323, %v533
      %v535 = vpop.f32.mrf.mxu0
      %536 = vmatprep.mubr.f32.mxu0 0.0
      %537 = vmatmul.mubr.f32.gmra.mxu0 %v357
      %v538 = vpop.f32.mrf.mxu0
      %v539 = vadd.f32 %v323, %v538
      %v540 = vpop.f32.mrf.mxu0
      %541 = vmatprep.mubr.f32.mxu0 0.0
      %542 = vmatmul.mubr.f32.gmra.mxu0 %v360
      %v543 = vpop.f32.mrf.mxu0
      %v544 = vadd.f32 %v323, %v543
      %v545 = vpop.f32.mrf.mxu0
      %546 = vmatprep.mubr.f32.mxu0 0.0
      %547 = vmatmul.mubr.f32.gmra.mxu0 %v363
      %v548 = vpop.f32.mrf.mxu0
      %v549 = vadd.f32 %v323, %v548
      %v550 = vpop.f32.mrf.mxu0
      %551 = vmatprep.mubr.f32.mxu0 0.0
      %552 = vmatmul.mubr.f32.gmra.mxu0 %v366
      %v553 = vpop.f32.mrf.mxu0
      %v554 = vadd.f32 %v323, %v553
      %v555 = vpop.f32.mrf.mxu0
      %556 = vmatprep.mubr.f32.mxu0 0.0
      %557 = vmatmul.mubr.f32.gmra.mxu0 %v369
      %v558 = vpop.f32.mrf.mxu0
      %v559 = vadd.f32 %v323, %v558
      %v560 = vpop.f32.mrf.mxu0
      %561 = vmatprep.mubr.f32.mxu0 0.0
      %562 = vmatmul.mubr.f32.gmra.mxu0 %v372
      %v563 = vpop.f32.mrf.mxu0
      %v564 = vadd.f32 %v323, %v563
      %v565 = vpop.f32.mrf.mxu0
      %566 = vmatprep.mubr.f32.mxu0 0.0
      %567 = vmatmul.mubr.f32.gmra.mxu0 %v375
      %v568 = vpop.f32.mrf.mxu0
      %v569 = vadd.f32 %v323, %v568
      %v570 = vpop.f32.mrf.mxu0
      %571 = vmatprep.mubr.f32.mxu0 0.0
      %572 = vmatmul.mubr.f32.gmra.mxu0 %v378
      %v573 = vpop.f32.mrf.mxu0
      %v574 = vadd.f32 %v323, %v573
      %v575 = vpop.f32.mrf.mxu0
      %576 = vmatprep.mubr.f32.mxu0 0.0
      %577 = vmatmul.mubr.f32.gmra.mxu0 %v381
      %v578 = vpop.f32.mrf.mxu0
      %v579 = vadd.f32 %v323, %v578
      %v580 = vpop.f32.mrf.mxu0
      %581 = vmatprep.mubr.f32.mxu0 0.0
      %582 = vmatmul.mubr.f32.gmra.mxu0 %v384
      %v583 = vpop.f32.mrf.mxu0
      %v584 = vadd.f32 %v323, %v583
      %v585 = vpop.f32.mrf.mxu0
      %586 = vmatprep.mubr.f32.mxu0 0.0
      %587 = vmatmul.mubr.f32.gmra.mxu0 %v387
      %v588 = vpop.f32.mrf.mxu0
      %v589 = vadd.f32 %v323, %v588
      %v590 = vpop.f32.mrf.mxu0
      %591 = vmatprep.mubr.f32.mxu0 0.0
      %592 = vmatmul.mubr.f32.gmra.mxu0 %v390
      %v593 = vpop.f32.mrf.mxu0
      %v594 = vadd.f32 %v323, %v593
      %v595 = vpop.f32.mrf.mxu0
      %596 = vmatprep.mubr.f32.mxu0 0.0
      %597 = vmatmul.mubr.f32.gmra.mxu0 %v393
      %v598 = vpop.f32.mrf.mxu0
      %v599 = vadd.f32 %v323, %v598
      %v600 = vpop.f32.mrf.mxu0
      %601 = vmatprep.mubr.f32.mxu0 0.0
      %602 = vmatmul.mubr.f32.gmra.mxu0 %v396
      %v603 = vpop.f32.mrf.mxu0
      %v604 = vadd.f32 %v323, %v603
      %v605 = vpop.f32.mrf.mxu0
      %606 = vmatprep.mubr.f32.mxu0 0.0
      %607 = vmatmul.mubr.f32.gmra.mxu0 %v399
      %v608 = vpop.f32.mrf.mxu0
      %v609 = vadd.f32 %v323, %v608
      %v610 = vpop.f32.mrf.mxu0
      %611 = vmatprep.mubr.f32.mxu0 0.0
      %612 = vmatmul.mubr.f32.gmra.mxu0 %v402
      %v613 = vpop.f32.mrf.mxu0
      %v614 = vadd.f32 %v323, %v613
      %v615 = vpop.f32.mrf.mxu0
      %616 = vmatprep.mubr.f32.mxu0 0.0
      %617 = vmatmul.mubr.f32.gmra.mxu0 %v405
      %v618 = vpop.f32.mrf.mxu0
      %v619 = vadd.f32 %v323, %v618
      %v620 = vpop.f32.mrf.mxu0
      %621 = vmatprep.mubr.f32.mxu0 0.0
      %622 = vmatmul.mubr.f32.gmra.mxu0 %v408
      %v623 = vpop.f32.mrf.mxu0
      %v624 = vadd.f32 %v323, %v623
      %v625 = vpop.f32.mrf.mxu0
      %626 = vmatprep.mubr.f32.mxu0 0.0
      %627 = vmatmul.mubr.f32.gmra.mxu0 %v411
      %v628 = vpop.f32.mrf.mxu0
      %v629 = vadd.f32 %v323, %v628
      %v630 = vpop.f32.mrf.mxu0
      %631 = vmatprep.mubr.f32.mxu0 0.0
      %632 = vmatmul.mubr.f32.gmra.mxu0 %v414
      %v633 = vpop.f32.mrf.mxu0
      %v634 = vadd.f32 %v323, %v633
      %v635 = vpop.f32.mrf.mxu0
      %636 = vmatprep.mubr.f32.mxu0 0.0
      %637 = vmatmul.mubr.f32.gmra.mxu0 %v417
      %v638 = vpop.f32.mrf.mxu0
      %v639 = vadd.f32 %v323, %v638
      %v640 = vpop.f32.mrf.mxu0
      %641 = vmatprep.mubr.f32.mxu0 0.0
      %642 = vmatmul.mubr.f32.gmra.mxu0 %v420
      %v643 = vpop.f32.mrf.mxu0
      %v644 = vadd.f32 %v323, %v643
      %v645 = vpop.f32.mrf.mxu0
      %646 = vdwg.mxu0
      %v647 = vmul.f32 %v489, 0.18181819
      %v648 = vmul.f32 %v494, 0.18181819
      %v649 = vmul.f32 %v499, 0.18181819
      %v650 = vmul.f32 %v504, 0.18181819
      %v651 = vmul.f32 %v509, 0.18181819
      %v652 = vmul.f32 %v514, 0.18181819
      %v653 = vmul.f32 %v519, 0.18181819
      %v654 = vmul.f32 %v524, 0.18181819
      %v655 = vmul.f32 %v529, 0.18181819
      %v656 = vmul.f32 %v534, 0.18181819
      %v657 = vmul.f32 %v539, 0.18181819
      %v658 = vmul.f32 %v544, 0.18181819
      %v659 = vmul.f32 %v549, 0.18181819
      %v660 = vmul.f32 %v554, 0.18181819
      %v661 = vmul.f32 %v559, 0.18181819
      %v662 = vmul.f32 %v564, 0.18181819
      %v663 = vmul.f32 %v569, 0.18181819
      %v664 = vmul.f32 %v574, 0.18181819
      %v665 = vmul.f32 %v579, 0.18181819
      %v666 = vmul.f32 %v584, 0.18181819
      %v667 = vmul.f32 %v589, 0.18181819
      %v668 = vmul.f32 %v594, 0.18181819
      %v669 = vmul.f32 %v599, 0.18181819
      %v670 = vmul.f32 %v604, 0.18181819
      %v671 = vmul.f32 %v609, 0.18181819
      %v672 = vmul.f32 %v614, 0.18181819
      %v673 = vmul.f32 %v619, 0.18181819
      %v674 = vmul.f32 %v624, 0.18181819
      %v675 = vmul.f32 %v629, 0.18181819
      %v676 = vmul.f32 %v634, 0.18181819
      %v677 = vmul.f32 %v639, 0.18181819
      %v678 = vmul.f32 %v644, 0.18181819
      %v679 = vmax.f32 %v489, %v647
      %v680 = vmax.f32 %v494, %v648
      %v681 = vmax.f32 %v499, %v649
      %v682 = vmax.f32 %v504, %v650
      %v683 = vmax.f32 %v509, %v651
      %v684 = vmax.f32 %v514, %v652
      %v685 = vmax.f32 %v519, %v653
      %v686 = vmax.f32 %v524, %v654
      %v687 = vmax.f32 %v529, %v655
      %v688 = vmax.f32 %v534, %v656
      %v689 = vmax.f32 %v539, %v657
      %v690 = vmax.f32 %v544, %v658
      %v691 = vmax.f32 %v549, %v659
      %v692 = vmax.f32 %v554, %v660
      %v693 = vmax.f32 %v559, %v661
      %v694 = vmax.f32 %v564, %v662
      %v695 = vmax.f32 %v569, %v663
      %v696 = vmax.f32 %v574, %v664
      %v697 = vmax.f32 %v579, %v665
      %v698 = vmax.f32 %v584, %v666
      %v699 = vmax.f32 %v589, %v667
      %v700 = vmax.f32 %v594, %v668
      %v701 = vmax.f32 %v599, %v669
      %v702 = vmax.f32 %v604, %v670
      %v703 = vmax.f32 %v609, %v671
      %v704 = vmax.f32 %v614, %v672
      %v705 = vmax.f32 %v619, %v673
      %v706 = vmax.f32 %v624, %v674
      %v707 = vmax.f32 %v629, %v675
      %v708 = vmax.f32 %v634, %v676
      %v709 = vmax.f32 %v639, %v677
      %v710 = vmax.f32 %v644, %v678
      %v711 = vld [vmem:[%s3] sm:$0xff]
      %v712 = vld [vmem:[%s3 + $0x8] sm:$0xff]
      %v713 = vld [vmem:[%s3 + $0x10] sm:$0xff]
      %v714 = vld [vmem:[%s3 + $0x18] sm:$0xff]
      %v715 = vld [vmem:[%s3 + $0x20] sm:$0xff]
      %v716 = vld [vmem:[%s3 + $0x28] sm:$0xff]
      %v717 = vld [vmem:[%s3 + $0x30] sm:$0xff]
      %v718 = vld [vmem:[%s3 + $0x38] sm:$0xff]
      %v719 = vld [vmem:[%s3 + $0x40] sm:$0xff]
      %v720 = vld [vmem:[%s3 + $0x48] sm:$0xff]
      %v721 = vld [vmem:[%s3 + $0x50] sm:$0xff]
      %v722 = vld [vmem:[%s3 + $0x58] sm:$0xff]
      %v723 = vld [vmem:[%s3 + $0x60] sm:$0xff]
      %v724 = vld [vmem:[%s3 + $0x68] sm:$0xff]
      %v725 = vld [vmem:[%s3 + $0x70] sm:$0xff]
      %v726 = vld [vmem:[%s3 + $0x78] sm:$0xff]
      %v727 = vld [vmem:[%s4] sm:$0x1]
      %v729 = vlaneseq
      %v730 = vshrl.u32 %v729, 7
      %v731 = vsub.s32 0, %v730
      %v732 = vrot.slane %v727, %v731
      %734 = vmatprep.subr.mxu0 0.0
      %735 = vmatpush1.msra.mxu0 %v726
      %736 = vmatprep.subr.mxu0 0.0
      %737 = vmatpush1.msra.mxu0 %v725
      %738 = vmatprep.subr.mxu0 0.0
      %739 = vmatpush1.msra.mxu0 %v724
      %740 = vmatprep.subr.mxu0 0.0
      %741 = vmatpush1.msra.mxu0 %v723
      %742 = vmatprep.subr.mxu0 0.0
      %743 = vmatpush1.msra.mxu0 %v722
      %744 = vmatprep.subr.mxu0 0.0
      %745 = vmatpush1.msra.mxu0 %v721
      %746 = vmatprep.subr.mxu0 0.0
      %747 = vmatpush1.msra.mxu0 %v720
      %748 = vmatprep.subr.mxu0 0.0
      %749 = vmatpush1.msra.mxu0 %v719
      %750 = vmatprep.subr.mxu0 0.0
      %751 = vmatpush1.msra.mxu0 %v718
      %752 = vmatprep.subr.mxu0 0.0
      %753 = vmatpush1.msra.mxu0 %v717
      %754 = vmatprep.subr.mxu0 0.0
      %755 = vmatpush1.msra.mxu0 %v716
      %756 = vmatprep.subr.mxu0 0.0
      %757 = vmatpush1.msra.mxu0 %v715
      %758 = vmatprep.subr.mxu0 0.0
      %759 = vmatpush1.msra.mxu0 %v714
      %760 = vmatprep.subr.mxu0 0.0
      %761 = vmatpush1.msra.mxu0 %v713
      %762 = vmatprep.subr.mxu0 0.0
      %763 = vmatpush1.msra.mxu0 %v712
      %764 = vmatprep.subr.mxu0 0.0
      %765 = vmatpush1.msra.mxu0 %v711
      %766 = vmatprep.subr.mxu0 0.0
      %767 = vmatpush2.msra.mxu0 0.0
      %768 = vmatprep.subr.mxu0 0.0
      %769 = vmatpush2.msra.mxu0 0.0
      %770 = vmatprep.subr.mxu0 0.0
      %771 = vmatpush2.msra.mxu0 0.0
      %772 = vmatprep.subr.mxu0 0.0
      %773 = vmatpush2.msra.mxu0 0.0
      %774 = vmatprep.subr.mxu0 0.0
      %775 = vmatpush2.msra.mxu0 0.0
      %776 = vmatprep.subr.mxu0 0.0
      %777 = vmatpush2.msra.mxu0 0.0
      %778 = vmatprep.subr.mxu0 0.0
      %779 = vmatpush2.msra.mxu0 0.0
      %780 = vmatprep.subr.mxu0 0.0
      %781 = vmatpush2.msra.mxu0 0.0
      %782 = vmatprep.subr.mxu0 0.0
      %783 = vmatpush2.msra.mxu0 0.0
      %784 = vmatprep.subr.mxu0 0.0
      %785 = vmatpush2.msra.mxu0 0.0
      %786 = vmatprep.subr.mxu0 0.0
      %787 = vmatpush2.msra.mxu0 0.0
      %788 = vmatprep.subr.mxu0 0.0
      %789 = vmatpush2.msra.mxu0 0.0
      %790 = vmatprep.subr.mxu0 0.0
      %791 = vmatpush2.msra.mxu0 0.0
      %792 = vmatprep.subr.mxu0 0.0
      %793 = vmatpush2.msra.mxu0 0.0
      %794 = vmatprep.subr.mxu0 0.0
      %795 = vmatpush2.msra.mxu0 0.0
      %796 = vmatprep.subr.mxu0 0.0
      %797 = vmatpush2.msra.mxu0 0.0
      %798 = vmatprep.mubr.f32.mxu0 0.0
      %799 = vmatmul.mubr.f32.gmra.mxu0 %v679
      %v800 = vpop.f32.mrf.mxu0
      %v801 = vadd.f32 %v732, %v800
      %v802 = vpop.f32.mrf.mxu0
      %803 = vmatprep.mubr.f32.mxu0 0.0
      %804 = vmatmul.mubr.f32.gmra.mxu0 %v680
      %v805 = vpop.f32.mrf.mxu0
      %v806 = vadd.f32 %v732, %v805
      %v807 = vpop.f32.mrf.mxu0
      %808 = vmatprep.mubr.f32.mxu0 0.0
      %809 = vmatmul.mubr.f32.gmra.mxu0 %v681
      %v810 = vpop.f32.mrf.mxu0
      %v811 = vadd.f32 %v732, %v810
      %v812 = vpop.f32.mrf.mxu0
      %813 = vmatprep.mubr.f32.mxu0 0.0
      %814 = vmatmul.mubr.f32.gmra.mxu0 %v682
      %v815 = vpop.f32.mrf.mxu0
      %v816 = vadd.f32 %v732, %v815
      %v817 = vpop.f32.mrf.mxu0
      %818 = vmatprep.mubr.f32.mxu0 0.0
      %819 = vmatmul.mubr.f32.gmra.mxu0 %v683
      %v820 = vpop.f32.mrf.mxu0
      %v821 = vadd.f32 %v732, %v820
      %v822 = vpop.f32.mrf.mxu0
      %823 = vmatprep.mubr.f32.mxu0 0.0
      %824 = vmatmul.mubr.f32.gmra.mxu0 %v684
      %v825 = vpop.f32.mrf.mxu0
      %v826 = vadd.f32 %v732, %v825
      %v827 = vpop.f32.mrf.mxu0
      %828 = vmatprep.mubr.f32.mxu0 0.0
      %829 = vmatmul.mubr.f32.gmra.mxu0 %v685
      %v830 = vpop.f32.mrf.mxu0
      %v831 = vadd.f32 %v732, %v830
      %v832 = vpop.f32.mrf.mxu0
      %833 = vmatprep.mubr.f32.mxu0 0.0
      %834 = vmatmul.mubr.f32.gmra.mxu0 %v686
      %v835 = vpop.f32.mrf.mxu0
      %v836 = vadd.f32 %v732, %v835
      %v837 = vpop.f32.mrf.mxu0
      %838 = vmatprep.mubr.f32.mxu0 0.0
      %839 = vmatmul.mubr.f32.gmra.mxu0 %v687
      %v840 = vpop.f32.mrf.mxu0
      %v841 = vadd.f32 %v732, %v840
      %v842 = vpop.f32.mrf.mxu0
      %843 = vmatprep.mubr.f32.mxu0 0.0
      %844 = vmatmul.mubr.f32.gmra.mxu0 %v688
      %v845 = vpop.f32.mrf.mxu0
      %v846 = vadd.f32 %v732, %v845
      %v847 = vpop.f32.mrf.mxu0
      %848 = vmatprep.mubr.f32.mxu0 0.0
      %849 = vmatmul.mubr.f32.gmra.mxu0 %v689
      %v850 = vpop.f32.mrf.mxu0
      %v851 = vadd.f32 %v732, %v850
      %v852 = vpop.f32.mrf.mxu0
      %853 = vmatprep.mubr.f32.mxu0 0.0
      %854 = vmatmul.mubr.f32.gmra.mxu0 %v690
      %v855 = vpop.f32.mrf.mxu0
      %v856 = vadd.f32 %v732, %v855
      %v857 = vpop.f32.mrf.mxu0
      %858 = vmatprep.mubr.f32.mxu0 0.0
      %859 = vmatmul.mubr.f32.gmra.mxu0 %v691
      %v860 = vpop.f32.mrf.mxu0
      %v861 = vadd.f32 %v732, %v860
      %v862 = vpop.f32.mrf.mxu0
      %863 = vmatprep.mubr.f32.mxu0 0.0
      %864 = vmatmul.mubr.f32.gmra.mxu0 %v692
      %v865 = vpop.f32.mrf.mxu0
      %v866 = vadd.f32 %v732, %v865
      %v867 = vpop.f32.mrf.mxu0
      %868 = vmatprep.mubr.f32.mxu0 0.0
      %869 = vmatmul.mubr.f32.gmra.mxu0 %v693
      %v870 = vpop.f32.mrf.mxu0
      %v871 = vadd.f32 %v732, %v870
      %v872 = vpop.f32.mrf.mxu0
      %873 = vmatprep.mubr.f32.mxu0 0.0
      %874 = vmatmul.mubr.f32.gmra.mxu0 %v694
      %v875 = vpop.f32.mrf.mxu0
      %v876 = vadd.f32 %v732, %v875
      %v877 = vpop.f32.mrf.mxu0
      %878 = vmatprep.mubr.f32.mxu0 0.0
      %879 = vmatmul.mubr.f32.gmra.mxu0 %v695
      %v880 = vpop.f32.mrf.mxu0
      %v881 = vadd.f32 %v732, %v880
      %v882 = vpop.f32.mrf.mxu0
      %883 = vmatprep.mubr.f32.mxu0 0.0
      %884 = vmatmul.mubr.f32.gmra.mxu0 %v696
      %v885 = vpop.f32.mrf.mxu0
      %v886 = vadd.f32 %v732, %v885
      %v887 = vpop.f32.mrf.mxu0
      %888 = vmatprep.mubr.f32.mxu0 0.0
      %889 = vmatmul.mubr.f32.gmra.mxu0 %v697
      %v890 = vpop.f32.mrf.mxu0
      %v891 = vadd.f32 %v732, %v890
      %v892 = vpop.f32.mrf.mxu0
      %893 = vmatprep.mubr.f32.mxu0 0.0
      %894 = vmatmul.mubr.f32.gmra.mxu0 %v698
      %v895 = vpop.f32.mrf.mxu0
      %v896 = vadd.f32 %v732, %v895
      %v897 = vpop.f32.mrf.mxu0
      %898 = vmatprep.mubr.f32.mxu0 0.0
      %899 = vmatmul.mubr.f32.gmra.mxu0 %v699
      %v900 = vpop.f32.mrf.mxu0
      %v901 = vadd.f32 %v732, %v900
      %v902 = vpop.f32.mrf.mxu0
      %903 = vmatprep.mubr.f32.mxu0 0.0
      %904 = vmatmul.mubr.f32.gmra.mxu0 %v700
      %v905 = vpop.f32.mrf.mxu0
      %v906 = vadd.f32 %v732, %v905
      %v907 = vpop.f32.mrf.mxu0
      %908 = vmatprep.mubr.f32.mxu0 0.0
      %909 = vmatmul.mubr.f32.gmra.mxu0 %v701
      %v910 = vpop.f32.mrf.mxu0
      %v911 = vadd.f32 %v732, %v910
      %v912 = vpop.f32.mrf.mxu0
      %913 = vmatprep.mubr.f32.mxu0 0.0
      %914 = vmatmul.mubr.f32.gmra.mxu0 %v702
      %v915 = vpop.f32.mrf.mxu0
      %v916 = vadd.f32 %v732, %v915
      %v917 = vpop.f32.mrf.mxu0
      %918 = vmatprep.mubr.f32.mxu0 0.0
      %919 = vmatmul.mubr.f32.gmra.mxu0 %v703
      %v920 = vpop.f32.mrf.mxu0
      %v921 = vadd.f32 %v732, %v920
      %v922 = vpop.f32.mrf.mxu0
      %923 = vmatprep.mubr.f32.mxu0 0.0
      %924 = vmatmul.mubr.f32.gmra.mxu0 %v704
      %v925 = vpop.f32.mrf.mxu0
      %v926 = vadd.f32 %v732, %v925
      %v927 = vpop.f32.mrf.mxu0
      %928 = vmatprep.mubr.f32.mxu0 0.0
      %929 = vmatmul.mubr.f32.gmra.mxu0 %v705
      %v930 = vpop.f32.mrf.mxu0
      %v931 = vadd.f32 %v732, %v930
      %v932 = vpop.f32.mrf.mxu0
      %933 = vmatprep.mubr.f32.mxu0 0.0
      %934 = vmatmul.mubr.f32.gmra.mxu0 %v706
      %v935 = vpop.f32.mrf.mxu0
      %v936 = vadd.f32 %v732, %v935
      %v937 = vpop.f32.mrf.mxu0
      %938 = vmatprep.mubr.f32.mxu0 0.0
      %939 = vmatmul.mubr.f32.gmra.mxu0 %v707
      %v940 = vpop.f32.mrf.mxu0
      %v941 = vadd.f32 %v732, %v940
      %v942 = vpop.f32.mrf.mxu0
      %943 = vmatprep.mubr.f32.mxu0 0.0
      %944 = vmatmul.mubr.f32.gmra.mxu0 %v708
      %v945 = vpop.f32.mrf.mxu0
      %v946 = vadd.f32 %v732, %v945
      %v947 = vpop.f32.mrf.mxu0
      %948 = vmatprep.mubr.f32.mxu0 0.0
      %949 = vmatmul.mubr.f32.gmra.mxu0 %v709
      %v950 = vpop.f32.mrf.mxu0
      %v951 = vadd.f32 %v732, %v950
      %v952 = vpop.f32.mrf.mxu0
      %953 = vmatprep.mubr.f32.mxu0 0.0
      %954 = vmatmul.mubr.f32.gmra.mxu0 %v710
      %v955 = vpop.f32.mrf.mxu0
      %v956 = vadd.f32 %v732, %v955
      %v957 = vpop.f32.mrf.mxu0
      %958 = vdwg.mxu0
      %v959 = vmul.f32 %v801, 0.18181819
      %v960 = vmul.f32 %v806, 0.18181819
      %v961 = vmul.f32 %v811, 0.18181819
      %v962 = vmul.f32 %v816, 0.18181819
      %v963 = vmul.f32 %v821, 0.18181819
      %v964 = vmul.f32 %v826, 0.18181819
      %v965 = vmul.f32 %v831, 0.18181819
      %v966 = vmul.f32 %v836, 0.18181819
      %v967 = vmul.f32 %v841, 0.18181819
      %v968 = vmul.f32 %v846, 0.18181819
      %v969 = vmul.f32 %v851, 0.18181819
      %v970 = vmul.f32 %v856, 0.18181819
      %v971 = vmul.f32 %v861, 0.18181819
      %v972 = vmul.f32 %v866, 0.18181819
      %v973 = vmul.f32 %v871, 0.18181819
      %v974 = vmul.f32 %v876, 0.18181819
      %v975 = vmul.f32 %v881, 0.18181819
      %v976 = vmul.f32 %v886, 0.18181819
      %v977 = vmul.f32 %v891, 0.18181819
      %v978 = vmul.f32 %v896, 0.18181819
      %v979 = vmul.f32 %v901, 0.18181819
      %v980 = vmul.f32 %v906, 0.18181819
      %v981 = vmul.f32 %v911, 0.18181819
      %v982 = vmul.f32 %v916, 0.18181819
      %v983 = vmul.f32 %v921, 0.18181819
      %v984 = vmul.f32 %v926, 0.18181819
      %v985 = vmul.f32 %v931, 0.18181819
      %v986 = vmul.f32 %v936, 0.18181819
      %v987 = vmul.f32 %v941, 0.18181819
      %v988 = vmul.f32 %v946, 0.18181819
      %v989 = vmul.f32 %v951, 0.18181819
      %v990 = vmul.f32 %v956, 0.18181819
      %v991 = vmax.f32 %v801, %v959
      %v992 = vmax.f32 %v806, %v960
      %v993 = vmax.f32 %v811, %v961
      %v994 = vmax.f32 %v816, %v962
      %v995 = vmax.f32 %v821, %v963
      %v996 = vmax.f32 %v826, %v964
      %v997 = vmax.f32 %v831, %v965
      %v998 = vmax.f32 %v836, %v966
      %v999 = vmax.f32 %v841, %v967
      %v1000 = vmax.f32 %v846, %v968
      %v1001 = vmax.f32 %v851, %v969
      %v1002 = vmax.f32 %v856, %v970
      %v1003 = vmax.f32 %v861, %v971
      %v1004 = vmax.f32 %v866, %v972
      %v1005 = vmax.f32 %v871, %v973
      %v1006 = vmax.f32 %v876, %v974
      %v1007 = vmax.f32 %v881, %v975
      %v1008 = vmax.f32 %v886, %v976
      %v1009 = vmax.f32 %v891, %v977
      %v1010 = vmax.f32 %v896, %v978
      %v1011 = vmax.f32 %v901, %v979
      %v1012 = vmax.f32 %v906, %v980
      %v1013 = vmax.f32 %v911, %v981
      %v1014 = vmax.f32 %v916, %v982
      %v1015 = vmax.f32 %v921, %v983
      %v1016 = vmax.f32 %v926, %v984
      %v1017 = vmax.f32 %v931, %v985
      %v1018 = vmax.f32 %v936, %v986
      %v1019 = vmax.f32 %v941, %v987
      %v1020 = vmax.f32 %v946, %v988
      %v1021 = vmax.f32 %v951, %v989
      %v1022 = vmax.f32 %v956, %v990
      %v1023 = vld [vmem:[%s5] sm:$0xff]
      %v1024 = vld [vmem:[%s5 + $0x8] sm:$0xff]
      %v1025 = vld [vmem:[%s5 + $0x10] sm:$0xff]
      %v1026 = vld [vmem:[%s5 + $0x18] sm:$0xff]
      %v1027 = vld [vmem:[%s5 + $0x20] sm:$0xff]
      %v1028 = vld [vmem:[%s5 + $0x28] sm:$0xff]
      %v1029 = vld [vmem:[%s5 + $0x30] sm:$0xff]
      %v1030 = vld [vmem:[%s5 + $0x38] sm:$0xff]
      %v1031 = vld [vmem:[%s5 + $0x40] sm:$0xff]
      %v1032 = vld [vmem:[%s5 + $0x48] sm:$0xff]
      %v1033 = vld [vmem:[%s5 + $0x50] sm:$0xff]
      %v1034 = vld [vmem:[%s5 + $0x58] sm:$0xff]
      %v1035 = vld [vmem:[%s5 + $0x60] sm:$0xff]
      %v1036 = vld [vmem:[%s5 + $0x68] sm:$0xff]
      %v1037 = vld [vmem:[%s5 + $0x70] sm:$0xff]
      %v1038 = vld [vmem:[%s5 + $0x78] sm:$0xff]
      %v1039 = vld [vmem:[%s6] sm:$0x1]
      %v1041 = vlaneseq
      %v1042 = vshrl.u32 %v1041, 7
      %v1043 = vsub.s32 0, %v1042
      %v1044 = vrot.slane %v1039, %v1043
      %1046 = vmatprep.subr.mxu0 0.0
      %1047 = vmatpush1.msra.mxu0 %v1038
      %1048 = vmatprep.subr.mxu0 0.0
      %1049 = vmatpush1.msra.mxu0 %v1037
      %1050 = vmatprep.subr.mxu0 0.0
      %1051 = vmatpush1.msra.mxu0 %v1036
      %1052 = vmatprep.subr.mxu0 0.0
      %1053 = vmatpush1.msra.mxu0 %v1035
      %1054 = vmatprep.subr.mxu0 0.0
      %1055 = vmatpush1.msra.mxu0 %v1034
      %1056 = vmatprep.subr.mxu0 0.0
      %1057 = vmatpush1.msra.mxu0 %v1033
      %1058 = vmatprep.subr.mxu0 0.0
      %1059 = vmatpush1.msra.mxu0 %v1032
      %1060 = vmatprep.subr.mxu0 0.0
      %1061 = vmatpush1.msra.mxu0 %v1031
      %1062 = vmatprep.subr.mxu0 0.0
      %1063 = vmatpush1.msra.mxu0 %v1030
      %1064 = vmatprep.subr.mxu0 0.0
      %1065 = vmatpush1.msra.mxu0 %v1029
      %1066 = vmatprep.subr.mxu0 0.0
      %1067 = vmatpush1.msra.mxu0 %v1028
      %1068 = vmatprep.subr.mxu0 0.0
      %1069 = vmatpush1.msra.mxu0 %v1027
      %1070 = vmatprep.subr.mxu0 0.0
      %1071 = vmatpush1.msra.mxu0 %v1026
      %1072 = vmatprep.subr.mxu0 0.0
      %1073 = vmatpush1.msra.mxu0 %v1025
      %1074 = vmatprep.subr.mxu0 0.0
      %1075 = vmatpush1.msra.mxu0 %v1024
      %1076 = vmatprep.subr.mxu0 0.0
      %1077 = vmatpush1.msra.mxu0 %v1023
      %1078 = vmatprep.subr.mxu0 0.0
      %1079 = vmatpush2.msra.mxu0 0.0
      %1080 = vmatprep.subr.mxu0 0.0
      %1081 = vmatpush2.msra.mxu0 0.0
      %1082 = vmatprep.subr.mxu0 0.0
      %1083 = vmatpush2.msra.mxu0 0.0
      %1084 = vmatprep.subr.mxu0 0.0
      %1085 = vmatpush2.msra.mxu0 0.0
      %1086 = vmatprep.subr.mxu0 0.0
      %1087 = vmatpush2.msra.mxu0 0.0
      %1088 = vmatprep.subr.mxu0 0.0
      %1089 = vmatpush2.msra.mxu0 0.0
      %1090 = vmatprep.subr.mxu0 0.0
      %1091 = vmatpush2.msra.mxu0 0.0
      %1092 = vmatprep.subr.mxu0 0.0
      %1093 = vmatpush2.msra.mxu0 0.0
      %1094 = vmatprep.subr.mxu0 0.0
      %1095 = vmatpush2.msra.mxu0 0.0
      %1096 = vmatprep.subr.mxu0 0.0
      %1097 = vmatpush2.msra.mxu0 0.0
      %1098 = vmatprep.subr.mxu0 0.0
      %1099 = vmatpush2.msra.mxu0 0.0
      %1100 = vmatprep.subr.mxu0 0.0
      %1101 = vmatpush2.msra.mxu0 0.0
      %1102 = vmatprep.subr.mxu0 0.0
      %1103 = vmatpush2.msra.mxu0 0.0
      %1104 = vmatprep.subr.mxu0 0.0
      %1105 = vmatpush2.msra.mxu0 0.0
      %1106 = vmatprep.subr.mxu0 0.0
      %1107 = vmatpush2.msra.mxu0 0.0
      %1108 = vmatprep.subr.mxu0 0.0
      %1109 = vmatpush2.msra.mxu0 0.0
      %1110 = vmatprep.mubr.f32.mxu0 0.0
      %1111 = vmatmul.mubr.f32.gmra.mxu0 %v991
      %v1112 = vpop.f32.mrf.mxu0
      %v1113 = vadd.f32 %v1044, %v1112
      %v1114 = vpop.f32.mrf.mxu0
      %1115 = vmatprep.mubr.f32.mxu0 0.0
      %1116 = vmatmul.mubr.f32.gmra.mxu0 %v992
      %v1117 = vpop.f32.mrf.mxu0
      %v1118 = vadd.f32 %v1044, %v1117
      %v1119 = vpop.f32.mrf.mxu0
      %1120 = vmatprep.mubr.f32.mxu0 0.0
      %1121 = vmatmul.mubr.f32.gmra.mxu0 %v993
      %v1122 = vpop.f32.mrf.mxu0
      %v1123 = vadd.f32 %v1044, %v1122
      %v1124 = vpop.f32.mrf.mxu0
      %1125 = vmatprep.mubr.f32.mxu0 0.0
      %1126 = vmatmul.mubr.f32.gmra.mxu0 %v994
      %v1127 = vpop.f32.mrf.mxu0
      %v1128 = vadd.f32 %v1044, %v1127
      %v1129 = vpop.f32.mrf.mxu0
      %1130 = vmatprep.mubr.f32.mxu0 0.0
      %1131 = vmatmul.mubr.f32.gmra.mxu0 %v995
      %v1132 = vpop.f32.mrf.mxu0
      %v1133 = vadd.f32 %v1044, %v1132
      %v1134 = vpop.f32.mrf.mxu0
      %1135 = vmatprep.mubr.f32.mxu0 0.0
      %1136 = vmatmul.mubr.f32.gmra.mxu0 %v996
      %v1137 = vpop.f32.mrf.mxu0
      %v1138 = vadd.f32 %v1044, %v1137
      %v1139 = vpop.f32.mrf.mxu0
      %1140 = vmatprep.mubr.f32.mxu0 0.0
      %1141 = vmatmul.mubr.f32.gmra.mxu0 %v997
      %v1142 = vpop.f32.mrf.mxu0
      %v1143 = vadd.f32 %v1044, %v1142
      %v1144 = vpop.f32.mrf.mxu0
      %1145 = vmatprep.mubr.f32.mxu0 0.0
      %1146 = vmatmul.mubr.f32.gmra.mxu0 %v998
      %v1147 = vpop.f32.mrf.mxu0
      %v1148 = vadd.f32 %v1044, %v1147
      %v1149 = vpop.f32.mrf.mxu0
      %1150 = vmatprep.mubr.f32.mxu0 0.0
      %1151 = vmatmul.mubr.f32.gmra.mxu0 %v999
      %v1152 = vpop.f32.mrf.mxu0
      %v1153 = vadd.f32 %v1044, %v1152
      %v1154 = vpop.f32.mrf.mxu0
      %1155 = vmatprep.mubr.f32.mxu0 0.0
      %1156 = vmatmul.mubr.f32.gmra.mxu0 %v1000
      %v1157 = vpop.f32.mrf.mxu0
      %v1158 = vadd.f32 %v1044, %v1157
      %v1159 = vpop.f32.mrf.mxu0
      %1160 = vmatprep.mubr.f32.mxu0 0.0
      %1161 = vmatmul.mubr.f32.gmra.mxu0 %v1001
      %v1162 = vpop.f32.mrf.mxu0
      %v1163 = vadd.f32 %v1044, %v1162
      %v1164 = vpop.f32.mrf.mxu0
      %1165 = vmatprep.mubr.f32.mxu0 0.0
      %1166 = vmatmul.mubr.f32.gmra.mxu0 %v1002
      %v1167 = vpop.f32.mrf.mxu0
      %v1168 = vadd.f32 %v1044, %v1167
      %v1169 = vpop.f32.mrf.mxu0
      %1170 = vmatprep.mubr.f32.mxu0 0.0
      %1171 = vmatmul.mubr.f32.gmra.mxu0 %v1003
      %v1172 = vpop.f32.mrf.mxu0
      %v1173 = vadd.f32 %v1044, %v1172
      %v1174 = vpop.f32.mrf.mxu0
      %1175 = vmatprep.mubr.f32.mxu0 0.0
      %1176 = vmatmul.mubr.f32.gmra.mxu0 %v1004
      %v1177 = vpop.f32.mrf.mxu0
      %v1178 = vadd.f32 %v1044, %v1177
      %v1179 = vpop.f32.mrf.mxu0
      %1180 = vmatprep.mubr.f32.mxu0 0.0
      %1181 = vmatmul.mubr.f32.gmra.mxu0 %v1005
      %v1182 = vpop.f32.mrf.mxu0
      %v1183 = vadd.f32 %v1044, %v1182
      %v1184 = vpop.f32.mrf.mxu0
      %1185 = vmatprep.mubr.f32.mxu0 0.0
      %1186 = vmatmul.mubr.f32.gmra.mxu0 %v1006
      %v1187 = vpop.f32.mrf.mxu0
      %v1188 = vadd.f32 %v1044, %v1187
      %v1189 = vpop.f32.mrf.mxu0
      %1190 = vmatprep.mubr.f32.mxu0 0.0
      %1191 = vmatmul.mubr.f32.gmra.mxu0 %v1007
      %v1192 = vpop.f32.mrf.mxu0
      %v1193 = vadd.f32 %v1044, %v1192
      %v1194 = vpop.f32.mrf.mxu0
      %1195 = vmatprep.mubr.f32.mxu0 0.0
      %1196 = vmatmul.mubr.f32.gmra.mxu0 %v1008
      %v1197 = vpop.f32.mrf.mxu0
      %v1198 = vadd.f32 %v1044, %v1197
      %v1199 = vpop.f32.mrf.mxu0
      %1200 = vmatprep.mubr.f32.mxu0 0.0
      %1201 = vmatmul.mubr.f32.gmra.mxu0 %v1009
      %v1202 = vpop.f32.mrf.mxu0
      %v1203 = vadd.f32 %v1044, %v1202
      %v1204 = vpop.f32.mrf.mxu0
      %1205 = vmatprep.mubr.f32.mxu0 0.0
      %1206 = vmatmul.mubr.f32.gmra.mxu0 %v1010
      %v1207 = vpop.f32.mrf.mxu0
      %v1208 = vadd.f32 %v1044, %v1207
      %v1209 = vpop.f32.mrf.mxu0
      %1210 = vmatprep.mubr.f32.mxu0 0.0
      %1211 = vmatmul.mubr.f32.gmra.mxu0 %v1011
      %v1212 = vpop.f32.mrf.mxu0
      %v1213 = vadd.f32 %v1044, %v1212
      %v1214 = vpop.f32.mrf.mxu0
      %1215 = vmatprep.mubr.f32.mxu0 0.0
      %1216 = vmatmul.mubr.f32.gmra.mxu0 %v1012
      %v1217 = vpop.f32.mrf.mxu0
      %v1218 = vadd.f32 %v1044, %v1217
      %v1219 = vpop.f32.mrf.mxu0
      %1220 = vmatprep.mubr.f32.mxu0 0.0
      %1221 = vmatmul.mubr.f32.gmra.mxu0 %v1013
      %v1222 = vpop.f32.mrf.mxu0
      %v1223 = vadd.f32 %v1044, %v1222
      %v1224 = vpop.f32.mrf.mxu0
      %1225 = vmatprep.mubr.f32.mxu0 0.0
      %1226 = vmatmul.mubr.f32.gmra.mxu0 %v1014
      %v1227 = vpop.f32.mrf.mxu0
      %v1228 = vadd.f32 %v1044, %v1227
      %v1229 = vpop.f32.mrf.mxu0
      %1230 = vmatprep.mubr.f32.mxu0 0.0
      %1231 = vmatmul.mubr.f32.gmra.mxu0 %v1015
      %v1232 = vpop.f32.mrf.mxu0
      %v1233 = vadd.f32 %v1044, %v1232
      %v1234 = vpop.f32.mrf.mxu0
      %1235 = vmatprep.mubr.f32.mxu0 0.0
      %1236 = vmatmul.mubr.f32.gmra.mxu0 %v1016
      %v1237 = vpop.f32.mrf.mxu0
      %v1238 = vadd.f32 %v1044, %v1237
      %v1239 = vpop.f32.mrf.mxu0
      %1240 = vmatprep.mubr.f32.mxu0 0.0
      %1241 = vmatmul.mubr.f32.gmra.mxu0 %v1017
      %v1242 = vpop.f32.mrf.mxu0
      %v1243 = vadd.f32 %v1044, %v1242
      %v1244 = vpop.f32.mrf.mxu0
      %1245 = vmatprep.mubr.f32.mxu0 0.0
      %1246 = vmatmul.mubr.f32.gmra.mxu0 %v1018
      %v1247 = vpop.f32.mrf.mxu0
      %v1248 = vadd.f32 %v1044, %v1247
      %v1249 = vpop.f32.mrf.mxu0
      %1250 = vmatprep.mubr.f32.mxu0 0.0
      %1251 = vmatmul.mubr.f32.gmra.mxu0 %v1019
      %v1252 = vpop.f32.mrf.mxu0
      %v1253 = vadd.f32 %v1044, %v1252
      %v1254 = vpop.f32.mrf.mxu0
      %1255 = vmatprep.mubr.f32.mxu0 0.0
      %1256 = vmatmul.mubr.f32.gmra.mxu0 %v1020
      %v1257 = vpop.f32.mrf.mxu0
      %v1258 = vadd.f32 %v1044, %v1257
      %v1259 = vpop.f32.mrf.mxu0
      %1260 = vmatprep.mubr.f32.mxu0 0.0
      %1261 = vmatmul.mubr.f32.gmra.mxu0 %v1021
      %v1262 = vpop.f32.mrf.mxu0
      %v1263 = vadd.f32 %v1044, %v1262
      %v1264 = vpop.f32.mrf.mxu0
      %1265 = vmatprep.mubr.f32.mxu0 0.0
      %1266 = vmatmul.mubr.f32.gmra.mxu0 %v1022
      %v1267 = vpop.f32.mrf.mxu0
      %v1268 = vadd.f32 %v1044, %v1267
      %v1269 = vpop.f32.mrf.mxu0
      %1270 = vdwg.mxu0
      %vm1271 = vcmask 130048
      %1272 = vst.msk [vmem:[%s280] sm:$0xff] %vm1271, %v1113
      %1273 = vst.msk [vmem:[%s280 + $0x8] sm:$0xff] %vm1271, %v1118
      %1274 = vst.msk [vmem:[%s280 + $0x10] sm:$0xff] %vm1271, %v1123
      %1275 = vst.msk [vmem:[%s280 + $0x18] sm:$0xff] %vm1271, %v1128
      %1276 = vst.msk [vmem:[%s280 + $0x20] sm:$0xff] %vm1271, %v1133
      %1277 = vst.msk [vmem:[%s280 + $0x28] sm:$0xff] %vm1271, %v1138
      %1278 = vst.msk [vmem:[%s280 + $0x30] sm:$0xff] %vm1271, %v1143
      %1279 = vst.msk [vmem:[%s280 + $0x38] sm:$0xff] %vm1271, %v1148
      %1280 = vst.msk [vmem:[%s280 + $0x40] sm:$0xff] %vm1271, %v1153
      %1281 = vst.msk [vmem:[%s280 + $0x48] sm:$0xff] %vm1271, %v1158
      %1282 = vst.msk [vmem:[%s280 + $0x50] sm:$0xff] %vm1271, %v1163
      %1283 = vst.msk [vmem:[%s280 + $0x58] sm:$0xff] %vm1271, %v1168
      %1284 = vst.msk [vmem:[%s280 + $0x60] sm:$0xff] %vm1271, %v1173
      %1285 = vst.msk [vmem:[%s280 + $0x68] sm:$0xff] %vm1271, %v1178
      %1286 = vst.msk [vmem:[%s280 + $0x70] sm:$0xff] %vm1271, %v1183
      %1287 = vst.msk [vmem:[%s280 + $0x78] sm:$0xff] %vm1271, %v1188
      %1288 = vst.msk [vmem:[%s280 + $0x80] sm:$0xff] %vm1271, %v1193
      %1289 = vst.msk [vmem:[%s280 + $0x88] sm:$0xff] %vm1271, %v1198
      %1290 = vst.msk [vmem:[%s280 + $0x90] sm:$0xff] %vm1271, %v1203
      %1291 = vst.msk [vmem:[%s280 + $0x98] sm:$0xff] %vm1271, %v1208
      %1292 = vst.msk [vmem:[%s280 + $0xa0] sm:$0xff] %vm1271, %v1213
      %1293 = vst.msk [vmem:[%s280 + $0xa8] sm:$0xff] %vm1271, %v1218
      %1294 = vst.msk [vmem:[%s280 + $0xb0] sm:$0xff] %vm1271, %v1223
      %1295 = vst.msk [vmem:[%s280 + $0xb8] sm:$0xff] %vm1271, %v1228
      %1296 = vst.msk [vmem:[%s280 + $0xc0] sm:$0xff] %vm1271, %v1233
      %1297 = vst.msk [vmem:[%s280 + $0xc8] sm:$0xff] %vm1271, %v1238
      %1298 = vst.msk [vmem:[%s280 + $0xd0] sm:$0xff] %vm1271, %v1243
      %1299 = vst.msk [vmem:[%s280 + $0xd8] sm:$0xff] %vm1271, %v1248
      %1300 = vst.msk [vmem:[%s280 + $0xe0] sm:$0xff] %vm1271, %v1253
      %1301 = vst.msk [vmem:[%s280 + $0xe8] sm:$0xff] %vm1271, %v1258
      %1302 = vst.msk [vmem:[%s280 + $0xf0] sm:$0xff] %vm1271, %v1263
      %1303 = vst.msk [vmem:[%s280 + $0xf8] sm:$0xff] %vm1271, %v1268
      %s1304 = smul.u32 32, %s18
      %p1305 = scmp.lt.s32.totalorder %s1304, 63
      %s1306 = scalar_select %p1305, %s1304, 63
      %s1307 = smul.addr %s1306, 8
      %s1308 = scalar_lea.vmem %s7, %s1307
      // Predicated region
      $region49: #{tpu_custom_call.1} parent=47 // pred_check
        %p1309 = pneg %p188
      $region50: #{tpu_custom_call.1} parent=47 // pred_check_branch
        %1311 = sbr.rel (%p1309) target = $region52
      $region51: #{tpu_custom_call.1} parent=47 // pred_region
        %s1312 = smul.u32 32, %s18
      $region52: #{tpu_custom_call.1} parent=47 // pred_fallthru
        _
    $region48: #{tpu_custom_call.1} parent=5 // pred_fallthru
      _
    %p1313 = scmp.le.s32.totalorder 2, %s13
    // Predicated region
    $region53: #{tpu_custom_call.1} parent=5 // pred_check
      %p1314 = pneg %p1313
    $region54: #{tpu_custom_call.1} parent=5 // pred_check_branch
      %1316 = sbr.rel (%p1314) target = $region56
    $region55: #{tpu_custom_call.1} parent=5 // pred_region
      %s1317 = ssub.s32 %s13, 2
      // Predicated region
      $region57: #{tpu_custom_call.1} parent=55 // pred_check
        %p1318 = pneg %p194
      $region58: #{tpu_custom_call.1} parent=55 // pred_check_branch
        %1320 = sbr.rel (%p1318) target = $region60
      $region59: #{tpu_custom_call.1} parent=55 // pred_region
        %s1321 = smul.u32 32, %s19
        %p1322 = scmp.lt.s32.totalorder %s1321, 63
        %s1323 = scalar_select %p1322, %s1321, 63
        %s1324 = smul.addr %s1323, 8
        %s1325 = scalar_lea.vmem %s7, %s1324
      $region60: #{tpu_custom_call.1} parent=55 // pred_fallthru
        _
    $region56: #{tpu_custom_call.1} parent=5 // pred_fallthru
      _
  $region6: #{tpu_custom_call.1} parent=0 // loop_footer
    %s17 = sadd.s32 1, %s13
  $region7: #{tpu_custom_call.1} parent=0 // loop_footer_branch
    %12 = sbr.rel target = $region3
  $region8: #{tpu_custom_call.1} parent=0 // loop_exit
    _

</llo_original>
